<compile_context>
chip_gen: v6e
topology: v6e:2x2x1
jax: 0.10.0
libtpu: 0.0.40
codegen_flags: <defaults>
</compile_context>

<pallas_src>
import jax
import jax.numpy as jnp
import numpy as np
from jax.experimental import pallas as pl
from jax.experimental.pallas import tpu as pltpu

PRE_HORIZON = 10
D = 128           # per-agent feature dim (Linear(256,128) => 128 + 128 concat)
N_SOCIAL = 6
NEG_SLOPE = 0.01  # nn.LeakyReLU default


def _leaky(v):
    return jnp.where(v > 0, v, NEG_SLOPE * v)


def _round_up(n, m):
    return (n + m - 1) // m * m


def forward_attention_kernel(
    # batch-tiled activations
    x_ref, xs1_ref, xs2_ref, xs3_ref, xs4_ref, xs5_ref, xs6_ref,
    # weights (resident across grid steps)
    w_ego_ref,    # (128, 256) = concat([w1[:128,:], wl1[128:,:]], axis=1), compute dtype
    w1s_ref,      # (128, 128) social half of model[0], compute dtype
    b1_ref,       # (1, 128)   f32
    w2_ref,       # (1, 128)   score weight as a row (VPU reduce), f32
    b2_ref,       # (1, 1)     scalar in SMEM, f32
    wl1a_ref,     # (128, 128) aggregation half of layer1, compute dtype
    bl1_ref,      # (1, 128)   f32
    wl3_ref,      # (128, 10)  compute dtype
    bl3_ref,      # (1, 10)    f32
    # outputs
    cc_ref, cc3_ref, att_ref,
):
    cdt = w_ego_ref.dtype                      # MXU input dtype (bf16 or f32)
    xs_refs = (xs1_ref, xs2_ref, xs3_ref, xs4_ref, xs5_ref, xs6_ref)

    x_f32 = x_ref[...].astype(jnp.float32)     # exact copy for the cc concat
    x_mx = x_ref[...].astype(cdt)
    TB = x_f32.shape[0]

    # ---- fused ego matmul: one (TB,128)x(128,256) MXU pass ----
    ego = jnp.dot(x_mx, w_ego_ref[...], preferred_element_type=jnp.float32)  # (TB,256)
    h_voc = ego[:, :D] + b1_ref[...]           # ego part of model[0] + its bias
    cc1_ego = ego[:, D:]                       # ego part of layer1 (bias added later)

    w1s = w1s_ref[...]
    w2row = w2_ref[...].astype(jnp.float32)    # (1,128)
    b2 = b2_ref[0, 0]                          # scalar from SMEM

    # ---- per-neighbor attention logits (unrolled, lane-dense (TB,128) ops) ----
    scores = []
    for n in range(N_SOCIAL):
        h_n = jnp.dot(xs_refs[n][...].astype(cdt), w1s,
                      preferred_element_type=jnp.float32) + h_voc            # (TB,128)
        h_n = _leaky(h_n)
        # N=1 "matmul" done on VPU + XLU lane reduction instead of the MXU.
        s_n = jnp.sum(h_n * w2row, axis=-1, keepdims=True) + b2              # (TB,1)
        scores.append(_leaky(s_n))

    # ---- softmax over the 6 neighbors (elementwise across the unrolled list) ----
    m = scores[0]
    for n in range(1, N_SOCIAL):
        m = jnp.maximum(m, scores[n])
    exps = [jnp.exp(s - m) for s in scores]
    denom = exps[0]
    for n in range(1, N_SOCIAL):
        denom = denom + exps[n]
    inv = 1.0 / denom
    atts = [e * inv for e in exps]                                           # 6 x (TB,1)

    # ---- aggregation = sum_n att_n * x_social_n : 6 VPU FMAs in f32 ----
    agg = atts[0] * xs_refs[0][...].astype(jnp.float32)
    for n in range(1, N_SOCIAL):
        agg = agg + atts[n] * xs_refs[n][...].astype(jnp.float32)            # (TB,128)

    # ---- cc = cat([aggregation, x], dim=1): single lane-dense 256-wide store ----
    cc = jnp.concatenate([agg, x_f32], axis=1)                               # (TB,256)
    cc_ref[...] = cc.astype(cc_ref.dtype)

    # ---- cc3 = layer3(LeakyReLU(layer1(cc))) ----
    cc1 = (jnp.dot(agg.astype(cdt), wl1a_ref[...],
                   preferred_element_type=jnp.float32)
           + cc1_ego + bl1_ref[...])                                         # (TB,128)
    cc2 = _leaky(cc1)
    cc3 = jnp.dot(cc2.astype(cdt), wl3_ref[...],
                  preferred_element_type=jnp.float32) + bl3_ref[...]         # (TB,10)
    cc3_ref[...] = cc3.astype(cc3_ref.dtype)

    # ---- attention scores as a 2-D (TB,6) tile (assembled with iota masks) ----
    lane = jax.lax.broadcasted_iota(jnp.int32, (1, N_SOCIAL), 1)             # (1,6)
    att2d = jnp.zeros((TB, N_SOCIAL), jnp.float32)
    for n in range(N_SOCIAL):
        att2d = att2d + jnp.where(lane == n, atts[n], 0.0)
    att_ref[...] = att2d.astype(att_ref.dtype)


def forward_attention(x, x1, x2, x3, x4, x5, x6, params,
                      *, compute_dtype=jnp.bfloat16, block_b=256):
    """Pallas implementation of Forward_attention.forward.

    compute_dtype: dtype fed to the MXU (accumulation is always f32).
    block_b:       batch tile size (multiple of 8; per-step VMEM ~ a few MiB,
                   well under the 32 MiB scoped / 64 MiB physical v7x limit).
    """
    (w1, b1, w2, b2, wl1, bl1, wl3, bl3) = params
    B = x.shape[0]
    out_dtype = jnp.float32

    TB = _round_up(min(block_b, _round_up(B, 8)), 8)
    B_pad = _round_up(B, TB)
    grid = (B_pad // TB,)

    socials = (x1, x2, x3, x4, x5, x6)
    if B_pad != B:
        pad = ((0, B_pad - B), (0, 0))
        x = jnp.pad(x, pad)
        socials = tuple(jnp.pad(s, pad) for s in socials)

    # One-time weight prep (cheap): split the (256,128) weights on the concat
    # boundary and fuse the two ego-sided halves into one (128,256) matrix.
    w_ego = jnp.concatenate([w1[:D, :], wl1[D:, :]], axis=1).astype(compute_dtype)
    w1s = w1[D:, :].astype(compute_dtype)          # social half of model[0]
    wl1a = wl1[:D, :].astype(compute_dtype)        # aggregation half of layer1
    wl3c = wl3.astype(compute_dtype)
    w2row = w2.reshape(1, D).astype(jnp.float32)   # score weight as a row vector
    b2s = b2.reshape(1, 1).astype(jnp.float32)     # true scalar -> SMEM
    b1f = b1.astype(jnp.float32)
    bl1f = bl1.astype(jnp.float32)
    bl3f = bl3.astype(jnp.float32)

    vmem = pltpu.MemorySpace.VMEM
    smem = pltpu.MemorySpace.SMEM

    row_spec = pl.BlockSpec((TB, D), lambda i: (i, 0), memory_space=vmem)

    def full(shape):
        return pl.BlockSpec(shape, lambda i: (0,) * len(shape), memory_space=vmem)

    in_specs = (
        [row_spec] * 7                      # x, x1..x6
        + [full((D, 2 * D)),                # w_ego
           full((D, D)),                    # w1s
           full((1, D)),                    # b1
           full((1, D)),                    # w2row
           pl.BlockSpec(memory_space=smem), # b2 scalar
           full((D, D)),                    # wl1a
           full((1, D)),                    # bl1
           full((D, PRE_HORIZON)),          # wl3
           full((1, PRE_HORIZON))]          # bl3
    )
    out_specs = (
        pl.BlockSpec((TB, 2 * D), lambda i: (i, 0), memory_space=vmem),        # cc
        pl.BlockSpec((TB, PRE_HORIZON), lambda i: (i, 0), memory_space=vmem),  # cc3
        pl.BlockSpec((TB, N_SOCIAL), lambda i: (i, 0), memory_space=vmem),     # att (2-D)
    )
    out_shapes = (
        jax.ShapeDtypeStruct((B_pad, 2 * D), out_dtype),
        jax.ShapeDtypeStruct((B_pad, PRE_HORIZON), out_dtype),
        jax.ShapeDtypeStruct((B_pad, N_SOCIAL), out_dtype),
    )

    cc, cc3, att = pl.pallas_call(
        forward_attention_kernel,
        grid=grid,
        in_specs=in_specs,
        out_specs=out_specs,
        out_shape=out_shapes,
        compiler_params=pltpu.CompilerParams(
            dimension_semantics=("parallel",)),   # batch tiles -> both TCs on v7x
    )(x, *socials, w_ego, w1s, b1f, w2row, b2s, wl1a, bl1f, wl3c, bl3f)

    if B_pad != B:
        cc, cc3, att = cc[:B], cc3[:B], att[:B]
    return cc, cc3, att[:, None, :]


def init_params(key):
    """Deterministic parameter init. Weights stored as (in, out); biases as (1, out).
    (A caller porting a PyTorch state_dict must transpose the weight matrices.)"""
    ks = jax.random.split(key, 8)

    def lin(kw, kb, fan_in, fan_out):
        bound = 1.0 / np.sqrt(fan_in)
        w = jax.random.uniform(kw, (fan_in, fan_out), jnp.float32, -bound, bound)
        b = jax.random.uniform(kb, (1, fan_out), jnp.float32, -bound, bound)
        return w, b

    w1, b1 = lin(ks[0], ks[1], 2 * D, D)            # model[0]: Linear(256, 128)
    w2, b2 = lin(ks[2], ks[3], D, 1)                # model[2]: Linear(128, 1)
    wl1, bl1 = lin(ks[4], ks[5], 2 * D, D)          # layer1:   Linear(256, 128)
    wl3, bl3 = lin(ks[6], ks[7], D, PRE_HORIZON)    # layer3:   Linear(128, 10)
    return (w1, b1, w2, b2, wl1, bl1, wl3, bl3)


def reference_forward(x, xs, params):
    """Pure-JAX reference mirroring the PyTorch forward (for validation)."""
    (w1, b1, w2, b2, wl1, bl1, wl3, bl3) = params
    B = x.shape[0]
    vocal = jnp.broadcast_to(x[:, None, :], (B, N_SOCIAL, D))
    Xf = jnp.concatenate([vocal, xs], axis=2)                        # (B, 6, 256)
    h = _leaky(Xf @ w1 + b1)
    s = _leaky(h @ w2 + b2)                                          # (B, 6, 1)
    att = jax.nn.softmax(s, axis=1)
    att_t = jnp.swapaxes(att, 1, 2)                                  # (B, 1, 6)
    agg = jnp.squeeze(att_t @ xs, axis=1)                            # (B, 128)
    cc = jnp.concatenate([agg, x], axis=1)
    cc3 = _leaky(cc @ wl1 + bl1) @ wl3 + bl3
    return cc, cc3, att_t


if __name__ == "__main__":
    key = jax.random.PRNGKey(0)
    k_in, k_p = jax.random.split(key)
    params = init_params(k_p)

    # Small case (B=2, single tile) and a tiled case (B=300 -> grid=(3,), padded).
    for B, block_b in ((2, 256), (300, 128)):
        ks = jax.random.split(jax.random.fold_in(k_in, B), 7)
        x = jax.random.normal(ks[0], (B, D), jnp.float32)
        socials = [jax.random.normal(ks[i + 1], (B, D), jnp.float32) for i in range(6)]

        xs = jnp.stack(socials, axis=1)
        cc_r, cc3_r, att_r = reference_forward(x, xs, params)

        # Exact path (f32 MXU inputs): tight check against the JAX reference.
        cc, cc3, att = forward_attention(x, *socials, params,
                                         compute_dtype=jnp.float32, block_b=block_b)
        jax.block_until_ready((cc, cc3, att))
        assert np.allclose(np.asarray(cc), np.asarray(cc_r), atol=1e-4, rtol=1e-4)
        assert np.allclose(np.asarray(cc3), np.asarray(cc3_r), atol=1e-4, rtol=1e-4)
        assert np.allclose(np.asarray(att), np.asarray(att_r), atol=1e-5, rtol=1e-4)

        # Fast path (bf16 MXU inputs, f32 accumulation): loose check.
        cc_b, cc3_b, att_b = forward_attention(x, *socials, params,
                                               compute_dtype=jnp.bfloat16,
                                               block_b=block_b)
        jax.block_until_ready((cc_b, cc3_b, att_b))
        assert np.allclose(np.asarray(cc_b), np.asarray(cc_r), atol=1e-1, rtol=1e-1)
        assert np.allclose(np.asarray(cc3_b), np.asarray(cc3_r), atol=1e-1, rtol=1e-1)
        assert np.allclose(np.asarray(att_b), np.asarray(att_r), atol=3e-2, rtol=3e-2)

    print("KERNEL_OK")
</pallas_src>

<mosaic_0001>
module attributes {stable_mosaic.version = 11 : i64} {
  func.func @forward_attention_kernel(%arg0: i32, %arg1: memref<8x128xf32, #tpu.memory_space<vmem>>, %arg2: memref<8x128xf32, #tpu.memory_space<vmem>>, %arg3: memref<8x128xf32, #tpu.memory_space<vmem>>, %arg4: memref<8x128xf32, #tpu.memory_space<vmem>>, %arg5: memref<8x128xf32, #tpu.memory_space<vmem>>, %arg6: memref<8x128xf32, #tpu.memory_space<vmem>>, %arg7: memref<8x128xf32, #tpu.memory_space<vmem>>, %arg8: memref<128x256xf32, #tpu.memory_space<vmem>>, %arg9: memref<128x128xf32, #tpu.memory_space<vmem>>, %arg10: memref<1x128xf32, #tpu.memory_space<vmem>>, %arg11: memref<1x128xf32, #tpu.memory_space<vmem>>, %arg12: memref<1x1xf32, #tpu.memory_space<smem>>, %arg13: memref<128x128xf32, #tpu.memory_space<vmem>>, %arg14: memref<1x128xf32, #tpu.memory_space<vmem>>, %arg15: memref<128x10xf32, #tpu.memory_space<vmem>>, %arg16: memref<1x10xf32, #tpu.memory_space<vmem>>, %arg17: memref<8x256xf32, #tpu.memory_space<vmem>>, %arg18: memref<8x10xf32, #tpu.memory_space<vmem>>, %arg19: memref<8x6xf32, #tpu.memory_space<vmem>>) attributes {dimension_semantics = [#tpu.dimension_semantics<parallel>], iteration_bounds = array<i64: 1>, scalar_prefetch = 0 : i64, scratch_operands = 0 : i64, tpu.core_type = #tpu.core_type<tc>, window_params = [{transform_indices = @transform_0, window_bounds = array<i64: 8, 128>}, {transform_indices = @transform_1, window_bounds = array<i64: 8, 128>}, {transform_indices = @transform_2, window_bounds = array<i64: 8, 128>}, {transform_indices = @transform_3, window_bounds = array<i64: 8, 128>}, {transform_indices = @transform_4, window_bounds = array<i64: 8, 128>}, {transform_indices = @transform_5, window_bounds = array<i64: 8, 128>}, {transform_indices = @transform_6, window_bounds = array<i64: 8, 128>}, {pipeline_mode = #tpu.pipeline_mode<synchronous>, transform_indices = @transform_7, window_bounds = array<i64: 128, 256>}, {pipeline_mode = #tpu.pipeline_mode<synchronous>, transform_indices = @transform_8, window_bounds = array<i64: 128, 128>}, {pipeline_mode = #tpu.pipeline_mode<synchronous>, transform_indices = @transform_9, window_bounds = array<i64: 1, 128>}, {pipeline_mode = #tpu.pipeline_mode<synchronous>, transform_indices = @transform_10, window_bounds = array<i64: 1, 128>}, {transform_indices = @transform_11, window_bounds = array<i64: 1, 1>}, {pipeline_mode = #tpu.pipeline_mode<synchronous>, transform_indices = @transform_12, window_bounds = array<i64: 128, 128>}, {pipeline_mode = #tpu.pipeline_mode<synchronous>, transform_indices = @transform_13, window_bounds = array<i64: 1, 128>}, {pipeline_mode = #tpu.pipeline_mode<synchronous>, transform_indices = @transform_14, window_bounds = array<i64: 128, 10>}, {pipeline_mode = #tpu.pipeline_mode<synchronous>, transform_indices = @transform_15, window_bounds = array<i64: 1, 10>}, {transform_indices = @transform_16, window_bounds = array<i64: 8, 256>}, {transform_indices = @transform_17, window_bounds = array<i64: 8, 10>}, {transform_indices = @transform_18, window_bounds = array<i64: 8, 6>}]} {
    %c0 = arith.constant 0 : index
    %c0_0 = arith.constant 0 : index
    %0 = vector.load %arg1[%c0, %c0_0] : memref<8x128xf32, #tpu.memory_space<vmem>>, vector<8x128xf32>
    %c0_1 = arith.constant 0 : index
    %c0_2 = arith.constant 0 : index
    %1 = vector.load %arg1[%c0_1, %c0_2] : memref<8x128xf32, #tpu.memory_space<vmem>>, vector<8x128xf32>
    %c0_3 = arith.constant 0 : index
    %c0_4 = arith.constant 0 : index
    %2 = vector.load %arg8[%c0_3, %c0_4] : memref<128x256xf32, #tpu.memory_space<vmem>>, vector<128x256xf32>
    %cst = arith.constant dense<0.000000e+00> : vector<8x256xf32>
    %3 = tpu.matmul %1, %2, %cst {dimension_numbers = #tpu.dot_dimension_numbers<[1], [0], [0], [1], [0, 0, 1, 1], [], []>} : vector<8x128xf32>, vector<128x256xf32>, vector<8x256xf32> -> vector<8x256xf32>
    %4 = vector.extract_strided_slice %3 {offsets = [0, 0], sizes = [8, 128], strides = [1, 1]} : vector<8x256xf32> to vector<8x128xf32>
    %c0_5 = arith.constant 0 : index
    %c0_6 = arith.constant 0 : index
    %5 = vector.load %arg10[%c0_5, %c0_6] : memref<1x128xf32, #tpu.memory_space<vmem>>, vector<1x128xf32>
    %6 = vector.broadcast %5 : vector<1x128xf32> to vector<8x128xf32>
    %7 = arith.addf %4, %6 : vector<8x128xf32>
    %8 = vector.extract_strided_slice %3 {offsets = [0, 128], sizes = [8, 128], strides = [1, 1]} : vector<8x256xf32> to vector<8x128xf32>
    %c0_7 = arith.constant 0 : index
    %c0_8 = arith.constant 0 : index
    %9 = vector.load %arg9[%c0_7, %c0_8] : memref<128x128xf32, #tpu.memory_space<vmem>>, vector<128x128xf32>
    %c0_9 = arith.constant 0 : index
    %c0_10 = arith.constant 0 : index
    %10 = vector.load %arg11[%c0_9, %c0_10] : memref<1x128xf32, #tpu.memory_space<vmem>>, vector<1x128xf32>
    %c0_11 = arith.constant 0 : index
    %c0_12 = arith.constant 0 : index
    %11 = memref.load %arg12[%c0_11, %c0_12] : memref<1x1xf32, #tpu.memory_space<smem>>
    %c0_13 = arith.constant 0 : index
    %c0_14 = arith.constant 0 : index
    %12 = vector.load %arg2[%c0_13, %c0_14] : memref<8x128xf32, #tpu.memory_space<vmem>>, vector<8x128xf32>
    %cst_15 = arith.constant dense<0.000000e+00> : vector<8x128xf32>
    %13 = tpu.matmul %12, %9, %cst_15 {dimension_numbers = #tpu.dot_dimension_numbers<[1], [0], [0], [1], [0, 0, 1, 1], [], []>} : vector<8x128xf32>, vector<128x128xf32>, vector<8x128xf32> -> vector<8x128xf32>
    %14 = arith.addf %13, %7 : vector<8x128xf32>
    %cst_16 = arith.constant 0.000000e+00 : f32
    %15 = vector.broadcast %cst_16 : f32 to vector<8x128xf32>
    %16 = arith.cmpf ogt, %14, %15 : vector<8x128xf32>
    %cst_17 = arith.constant 0.00999999977 : f32
    %17 = vector.broadcast %cst_17 : f32 to vector<8x128xf32>
    %18 = arith.mulf %17, %14 : vector<8x128xf32>
    %19 = arith.select %16, %14, %18 : vector<8x128xi1>, vector<8x128xf32>
    %20 = vector.broadcast %10 : vector<1x128xf32> to vector<8x128xf32>
    %21 = arith.mulf %19, %20 : vector<8x128xf32>
    %cst_18 = arith.constant dense<0.000000e+00> : vector<8xf32>
    %22 = vector.multi_reduction <add>, %21, %cst_18 [1] : vector<8x128xf32> to vector<8xf32>
    %23 = vector.shape_cast %22 : vector<8xf32> to vector<8x1xf32>
    %24 = vector.broadcast %11 : f32 to vector<8x1xf32>
    %25 = arith.addf %23, %24 : vector<8x1xf32>
    %cst_19 = arith.constant 0.000000e+00 : f32
    %26 = vector.broadcast %cst_19 : f32 to vector<8x1xf32>
    %27 = arith.cmpf ogt, %25, %26 : vector<8x1xf32>
    %cst_20 = arith.constant 0.00999999977 : f32
    %28 = vector.broadcast %cst_20 : f32 to vector<8x1xf32>
    %29 = arith.mulf %28, %25 : vector<8x1xf32>
    %30 = arith.select %27, %25, %29 : vector<8x1xi1>, vector<8x1xf32>
    %c0_21 = arith.constant 0 : index
    %c0_22 = arith.constant 0 : index
    %31 = vector.load %arg3[%c0_21, %c0_22] : memref<8x128xf32, #tpu.memory_space<vmem>>, vector<8x128xf32>
    %cst_23 = arith.constant dense<0.000000e+00> : vector<8x128xf32>
    %32 = tpu.matmul %31, %9, %cst_23 {dimension_numbers = #tpu.dot_dimension_numbers<[1], [0], [0], [1], [0, 0, 1, 1], [], []>} : vector<8x128xf32>, vector<128x128xf32>, vector<8x128xf32> -> vector<8x128xf32>
    %33 = arith.addf %32, %7 : vector<8x128xf32>
    %cst_24 = arith.constant 0.000000e+00 : f32
    %34 = vector.broadcast %cst_24 : f32 to vector<8x128xf32>
    %35 = arith.cmpf ogt, %33, %34 : vector<8x128xf32>
    %cst_25 = arith.constant 0.00999999977 : f32
    %36 = vector.broadcast %cst_25 : f32 to vector<8x128xf32>
    %37 = arith.mulf %36, %33 : vector<8x128xf32>
    %38 = arith.select %35, %33, %37 : vector<8x128xi1>, vector<8x128xf32>
    %39 = vector.broadcast %10 : vector<1x128xf32> to vector<8x128xf32>
    %40 = arith.mulf %38, %39 : vector<8x128xf32>
    %cst_26 = arith.constant dense<0.000000e+00> : vector<8xf32>
    %41 = vector.multi_reduction <add>, %40, %cst_26 [1] : vector<8x128xf32> to vector<8xf32>
    %42 = vector.shape_cast %41 : vector<8xf32> to vector<8x1xf32>
    %43 = vector.broadcast %11 : f32 to vector<8x1xf32>
    %44 = arith.addf %42, %43 : vector<8x1xf32>
    %cst_27 = arith.constant 0.000000e+00 : f32
    %45 = vector.broadcast %cst_27 : f32 to vector<8x1xf32>
    %46 = arith.cmpf ogt, %44, %45 : vector<8x1xf32>
    %cst_28 = arith.constant 0.00999999977 : f32
    %47 = vector.broadcast %cst_28 : f32 to vector<8x1xf32>
    %48 = arith.mulf %47, %44 : vector<8x1xf32>
    %49 = arith.select %46, %44, %48 : vector<8x1xi1>, vector<8x1xf32>
    %c0_29 = arith.constant 0 : index
    %c0_30 = arith.constant 0 : index
    %50 = vector.load %arg4[%c0_29, %c0_30] : memref<8x128xf32, #tpu.memory_space<vmem>>, vector<8x128xf32>
    %cst_31 = arith.constant dense<0.000000e+00> : vector<8x128xf32>
    %51 = tpu.matmul %50, %9, %cst_31 {dimension_numbers = #tpu.dot_dimension_numbers<[1], [0], [0], [1], [0, 0, 1, 1], [], []>} : vector<8x128xf32>, vector<128x128xf32>, vector<8x128xf32> -> vector<8x128xf32>
    %52 = arith.addf %51, %7 : vector<8x128xf32>
    %cst_32 = arith.constant 0.000000e+00 : f32
    %53 = vector.broadcast %cst_32 : f32 to vector<8x128xf32>
    %54 = arith.cmpf ogt, %52, %53 : vector<8x128xf32>
    %cst_33 = arith.constant 0.00999999977 : f32
    %55 = vector.broadcast %cst_33 : f32 to vector<8x128xf32>
    %56 = arith.mulf %55, %52 : vector<8x128xf32>
    %57 = arith.select %54, %52, %56 : vector<8x128xi1>, vector<8x128xf32>
    %58 = vector.broadcast %10 : vector<1x128xf32> to vector<8x128xf32>
    %59 = arith.mulf %57, %58 : vector<8x128xf32>
    %cst_34 = arith.constant dense<0.000000e+00> : vector<8xf32>
    %60 = vector.multi_reduction <add>, %59, %cst_34 [1] : vector<8x128xf32> to vector<8xf32>
    %61 = vector.shape_cast %60 : vector<8xf32> to vector<8x1xf32>
    %62 = vector.broadcast %11 : f32 to vector<8x1xf32>
    %63 = arith.addf %61, %62 : vector<8x1xf32>
    %cst_35 = arith.constant 0.000000e+00 : f32
    %64 = vector.broadcast %cst_35 : f32 to vector<8x1xf32>
    %65 = arith.cmpf ogt, %63, %64 : vector<8x1xf32>
    %cst_36 = arith.constant 0.00999999977 : f32
    %66 = vector.broadcast %cst_36 : f32 to vector<8x1xf32>
    %67 = arith.mulf %66, %63 : vector<8x1xf32>
    %68 = arith.select %65, %63, %67 : vector<8x1xi1>, vector<8x1xf32>
    %c0_37 = arith.constant 0 : index
    %c0_38 = arith.constant 0 : index
    %69 = vector.load %arg5[%c0_37, %c0_38] : memref<8x128xf32, #tpu.memory_space<vmem>>, vector<8x128xf32>
    %cst_39 = arith.constant dense<0.000000e+00> : vector<8x128xf32>
    %70 = tpu.matmul %69, %9, %cst_39 {dimension_numbers = #tpu.dot_dimension_numbers<[1], [0], [0], [1], [0, 0, 1, 1], [], []>} : vector<8x128xf32>, vector<128x128xf32>, vector<8x128xf32> -> vector<8x128xf32>
    %71 = arith.addf %70, %7 : vector<8x128xf32>
    %cst_40 = arith.constant 0.000000e+00 : f32
    %72 = vector.broadcast %cst_40 : f32 to vector<8x128xf32>
    %73 = arith.cmpf ogt, %71, %72 : vector<8x128xf32>
    %cst_41 = arith.constant 0.00999999977 : f32
    %74 = vector.broadcast %cst_41 : f32 to vector<8x128xf32>
    %75 = arith.mulf %74, %71 : vector<8x128xf32>
    %76 = arith.select %73, %71, %75 : vector<8x128xi1>, vector<8x128xf32>
    %77 = vector.broadcast %10 : vector<1x128xf32> to vector<8x128xf32>
    %78 = arith.mulf %76, %77 : vector<8x128xf32>
    %cst_42 = arith.constant dense<0.000000e+00> : vector<8xf32>
    %79 = vector.multi_reduction <add>, %78, %cst_42 [1] : vector<8x128xf32> to vector<8xf32>
    %80 = vector.shape_cast %79 : vector<8xf32> to vector<8x1xf32>
    %81 = vector.broadcast %11 : f32 to vector<8x1xf32>
    %82 = arith.addf %80, %81 : vector<8x1xf32>
    %cst_43 = arith.constant 0.000000e+00 : f32
    %83 = vector.broadcast %cst_43 : f32 to vector<8x1xf32>
    %84 = arith.cmpf ogt, %82, %83 : vector<8x1xf32>
    %cst_44 = arith.constant 0.00999999977 : f32
    %85 = vector.broadcast %cst_44 : f32 to vector<8x1xf32>
    %86 = arith.mulf %85, %82 : vector<8x1xf32>
    %87 = arith.select %84, %82, %86 : vector<8x1xi1>, vector<8x1xf32>
    %c0_45 = arith.constant 0 : index
    %c0_46 = arith.constant 0 : index
    %88 = vector.load %arg6[%c0_45, %c0_46] : memref<8x128xf32, #tpu.memory_space<vmem>>, vector<8x128xf32>
    %cst_47 = arith.constant dense<0.000000e+00> : vector<8x128xf32>
    %89 = tpu.matmul %88, %9, %cst_47 {dimension_numbers = #tpu.dot_dimension_numbers<[1], [0], [0], [1], [0, 0, 1, 1], [], []>} : vector<8x128xf32>, vector<128x128xf32>, vector<8x128xf32> -> vector<8x128xf32>
    %90 = arith.addf %89, %7 : vector<8x128xf32>
    %cst_48 = arith.constant 0.000000e+00 : f32
    %91 = vector.broadcast %cst_48 : f32 to vector<8x128xf32>
    %92 = arith.cmpf ogt, %90, %91 : vector<8x128xf32>
    %cst_49 = arith.constant 0.00999999977 : f32
    %93 = vector.broadcast %cst_49 : f32 to vector<8x128xf32>
    %94 = arith.mulf %93, %90 : vector<8x128xf32>
    %95 = arith.select %92, %90, %94 : vector<8x128xi1>, vector<8x128xf32>
    %96 = vector.broadcast %10 : vector<1x128xf32> to vector<8x128xf32>
    %97 = arith.mulf %95, %96 : vector<8x128xf32>
    %cst_50 = arith.constant dense<0.000000e+00> : vector<8xf32>
    %98 = vector.multi_reduction <add>, %97, %cst_50 [1] : vector<8x128xf32> to vector<8xf32>
    %99 = vector.shape_cast %98 : vector<8xf32> to vector<8x1xf32>
    %100 = vector.broadcast %11 : f32 to vector<8x1xf32>
    %101 = arith.addf %99, %100 : vector<8x1xf32>
    %cst_51 = arith.constant 0.000000e+00 : f32
    %102 = vector.broadcast %cst_51 : f32 to vector<8x1xf32>
    %103 = arith.cmpf ogt, %101, %102 : vector<8x1xf32>
    %cst_52 = arith.constant 0.00999999977 : f32
    %104 = vector.broadcast %cst_52 : f32 to vector<8x1xf32>
    %105 = arith.mulf %104, %101 : vector<8x1xf32>
    %106 = arith.select %103, %101, %105 : vector<8x1xi1>, vector<8x1xf32>
    %c0_53 = arith.constant 0 : index
    %c0_54 = arith.constant 0 : index
    %107 = vector.load %arg7[%c0_53, %c0_54] : memref<8x128xf32, #tpu.memory_space<vmem>>, vector<8x128xf32>
    %cst_55 = arith.constant dense<0.000000e+00> : vector<8x128xf32>
    %108 = tpu.matmul %107, %9, %cst_55 {dimension_numbers = #tpu.dot_dimension_numbers<[1], [0], [0], [1], [0, 0, 1, 1], [], []>} : vector<8x128xf32>, vector<128x128xf32>, vector<8x128xf32> -> vector<8x128xf32>
    %109 = arith.addf %108, %7 : vector<8x128xf32>
    %cst_56 = arith.constant 0.000000e+00 : f32
    %110 = vector.broadcast %cst_56 : f32 to vector<8x128xf32>
    %111 = arith.cmpf ogt, %109, %110 : vector<8x128xf32>
    %cst_57 = arith.constant 0.00999999977 : f32
    %112 = vector.broadcast %cst_57 : f32 to vector<8x128xf32>
    %113 = arith.mulf %112, %109 : vector<8x128xf32>
    %114 = arith.select %111, %109, %113 : vector<8x128xi1>, vector<8x128xf32>
    %115 = vector.broadcast %10 : vector<1x128xf32> to vector<8x128xf32>
    %116 = arith.mulf %114, %115 : vector<8x128xf32>
    %cst_58 = arith.constant dense<0.000000e+00> : vector<8xf32>
    %117 = vector.multi_reduction <add>, %116, %cst_58 [1] : vector<8x128xf32> to vector<8xf32>
    %118 = vector.shape_cast %117 : vector<8xf32> to vector<8x1xf32>
    %119 = vector.broadcast %11 : f32 to vector<8x1xf32>
    %120 = arith.addf %118, %119 : vector<8x1xf32>
    %cst_59 = arith.constant 0.000000e+00 : f32
    %121 = vector.broadcast %cst_59 : f32 to vector<8x1xf32>
    %122 = arith.cmpf ogt, %120, %121 : vector<8x1xf32>
    %cst_60 = arith.constant 0.00999999977 : f32
    %123 = vector.broadcast %cst_60 : f32 to vector<8x1xf32>
    %124 = arith.mulf %123, %120 : vector<8x1xf32>
    %125 = arith.select %122, %120, %124 : vector<8x1xi1>, vector<8x1xf32>
    %126 = arith.maximumf %30, %49 : vector<8x1xf32>
    %127 = arith.maximumf %126, %68 : vector<8x1xf32>
    %128 = arith.maximumf %127, %87 : vector<8x1xf32>
    %129 = arith.maximumf %128, %106 : vector<8x1xf32>
    %130 = arith.maximumf %129, %125 : vector<8x1xf32>
    %131 = arith.subf %30, %130 : vector<8x1xf32>
    %132 = math.exp %131 : vector<8x1xf32>
    %133 = arith.subf %49, %130 : vector<8x1xf32>
    %134 = math.exp %133 : vector<8x1xf32>
    %135 = arith.subf %68, %130 : vector<8x1xf32>
    %136 = math.exp %135 : vector<8x1xf32>
    %137 = arith.subf %87, %130 : vector<8x1xf32>
    %138 = math.exp %137 : vector<8x1xf32>
    %139 = arith.subf %106, %130 : vector<8x1xf32>
    %140 = math.exp %139 : vector<8x1xf32>
    %141 = arith.subf %125, %130 : vector<8x1xf32>
    %142 = math.exp %141 : vector<8x1xf32>
    %143 = arith.addf %132, %134 : vector<8x1xf32>
    %144 = arith.addf %143, %136 : vector<8x1xf32>
    %145 = arith.addf %144, %138 : vector<8x1xf32>
    %146 = arith.addf %145, %140 : vector<8x1xf32>
    %147 = arith.addf %146, %142 : vector<8x1xf32>
    %cst_61 = arith.constant 1.000000e+00 : f32
    %148 = vector.broadcast %cst_61 : f32 to vector<8x1xf32>
    %149 = arith.divf %148, %147 : vector<8x1xf32>
    %150 = arith.mulf %132, %149 : vector<8x1xf32>
    %151 = arith.mulf %134, %149 : vector<8x1xf32>
    %152 = arith.mulf %136, %149 : vector<8x1xf32>
    %153 = arith.mulf %138, %149 : vector<8x1xf32>
    %154 = arith.mulf %140, %149 : vector<8x1xf32>
    %155 = arith.mulf %142, %149 : vector<8x1xf32>
    %c0_62 = arith.constant 0 : index
    %c0_63 = arith.constant 0 : index
    %156 = vector.load %arg2[%c0_62, %c0_63] : memref<8x128xf32, #tpu.memory_space<vmem>>, vector<8x128xf32>
    %157 = vector.broadcast %150 : vector<8x1xf32> to vector<8x128xf32>
    %158 = arith.mulf %157, %156 : vector<8x128xf32>
    %c0_64 = arith.constant 0 : index
    %c0_65 = arith.constant 0 : index
    %159 = vector.load %arg3[%c0_64, %c0_65] : memref<8x128xf32, #tpu.memory_space<vmem>>, vector<8x128xf32>
    %160 = vector.broadcast %151 : vector<8x1xf32> to vector<8x128xf32>
    %161 = arith.mulf %160, %159 : vector<8x128xf32>
    %162 = arith.addf %158, %161 : vector<8x128xf32>
    %c0_66 = arith.constant 0 : index
    %c0_67 = arith.constant 0 : index
    %163 = vector.load %arg4[%c0_66, %c0_67] : memref<8x128xf32, #tpu.memory_space<vmem>>, vector<8x128xf32>
    %164 = vector.broadcast %152 : vector<8x1xf32> to vector<8x128xf32>
    %165 = arith.mulf %164, %163 : vector<8x128xf32>
    %166 = arith.addf %162, %165 : vector<8x128xf32>
    %c0_68 = arith.constant 0 : index
    %c0_69 = arith.constant 0 : index
    %167 = vector.load %arg5[%c0_68, %c0_69] : memref<8x128xf32, #tpu.memory_space<vmem>>, vector<8x128xf32>
    %168 = vector.broadcast %153 : vector<8x1xf32> to vector<8x128xf32>
    %169 = arith.mulf %168, %167 : vector<8x128xf32>
    %170 = arith.addf %166, %169 : vector<8x128xf32>
    %c0_70 = arith.constant 0 : index
    %c0_71 = arith.constant 0 : index
    %171 = vector.load %arg6[%c0_70, %c0_71] : memref<8x128xf32, #tpu.memory_space<vmem>>, vector<8x128xf32>
    %172 = vector.broadcast %154 : vector<8x1xf32> to vector<8x128xf32>
    %173 = arith.mulf %172, %171 : vector<8x128xf32>
    %174 = arith.addf %170, %173 : vector<8x128xf32>
    %c0_72 = arith.constant 0 : index
    %c0_73 = arith.constant 0 : index
    %175 = vector.load %arg7[%c0_72, %c0_73] : memref<8x128xf32, #tpu.memory_space<vmem>>, vector<8x128xf32>
    %176 = vector.broadcast %155 : vector<8x1xf32> to vector<8x128xf32>
    %177 = arith.mulf %176, %175 : vector<8x128xf32>
    %178 = arith.addf %174, %177 : vector<8x128xf32>
    %179 = tpu.concatenate %178, %0 in 1 : vector<8x128xf32>, vector<8x128xf32> -> vector<8x256xf32>
    %c0_74 = arith.constant 0 : index
    %c0_75 = arith.constant 0 : index
    %180 = vector.load %arg17[%c0_74, %c0_75] : memref<8x256xf32, #tpu.memory_space<vmem>>, vector<8x256xf32>
    tpu.vector_store %arg17[%c0_74, %c0_75], %179 {strides = array<i32>} : memref<8x256xf32, #tpu.memory_space<vmem>>, vector<8x256xf32>,
    %c0_76 = arith.constant 0 : index
    %c0_77 = arith.constant 0 : index
    %181 = vector.load %arg13[%c0_76, %c0_77] : memref<128x128xf32, #tpu.memory_space<vmem>>, vector<128x128xf32>
    %cst_78 = arith.constant dense<0.000000e+00> : vector<8x128xf32>
    %182 = tpu.matmul %178, %181, %cst_78 {dimension_numbers = #tpu.dot_dimension_numbers<[1], [0], [0], [1], [0, 0, 1, 1], [], []>} : vector<8x128xf32>, vector<128x128xf32>, vector<8x128xf32> -> vector<8x128xf32>
    %183 = arith.addf %182, %8 : vector<8x128xf32>
    %c0_79 = arith.constant 0 : index
    %c0_80 = arith.constant 0 : index
    %184 = vector.load %arg14[%c0_79, %c0_80] : memref<1x128xf32, #tpu.memory_space<vmem>>, vector<1x128xf32>
    %185 = vector.broadcast %184 : vector<1x128xf32> to vector<8x128xf32>
    %186 = arith.addf %183, %185 : vector<8x128xf32>
    %cst_81 = arith.constant 0.000000e+00 : f32
    %187 = vector.broadcast %cst_81 : f32 to vector<8x128xf32>
    %188 = arith.cmpf ogt, %186, %187 : vector<8x128xf32>
    %cst_82 = arith.constant 0.00999999977 : f32
    %189 = vector.broadcast %cst_82 : f32 to vector<8x128xf32>
    %190 = arith.mulf %189, %186 : vector<8x128xf32>
    %191 = arith.select %188, %186, %190 : vector<8x128xi1>, vector<8x128xf32>
    %c0_83 = arith.constant 0 : index
    %c0_84 = arith.constant 0 : index
    %192 = vector.load %arg15[%c0_83, %c0_84] : memref<128x10xf32, #tpu.memory_space<vmem>>, vector<128x10xf32>
    %cst_85 = arith.constant dense<0.000000e+00> : vector<8x10xf32>
    %193 = tpu.matmul %191, %192, %cst_85 {dimension_numbers = #tpu.dot_dimension_numbers<[1], [0], [0], [1], [0, 0, 1, 1], [], []>} : vector<8x128xf32>, vector<128x10xf32>, vector<8x10xf32> -> vector<8x10xf32>
    %c0_86 = arith.constant 0 : index
    %c0_87 = arith.constant 0 : index
    %194 = vector.load %arg16[%c0_86, %c0_87] : memref<1x10xf32, #tpu.memory_space<vmem>>, vector<1x10xf32>
    %195 = vector.broadcast %194 : vector<1x10xf32> to vector<8x10xf32>
    %196 = arith.addf %193, %195 : vector<8x10xf32>
    %c0_88 = arith.constant 0 : index
    %c0_89 = arith.constant 0 : index
    %197 = vector.load %arg18[%c0_88, %c0_89] : memref<8x10xf32, #tpu.memory_space<vmem>>, vector<8x10xf32>
    tpu.vector_store %arg18[%c0_88, %c0_89], %196 {strides = array<i32>} : memref<8x10xf32, #tpu.memory_space<vmem>>, vector<8x10xf32>,
    %198 = tpu.iota {dimensions = array<i32: 1>} : vector<1x6xi32>
    %cst_90 = arith.constant 0.000000e+00 : f32
    %199 = vector.broadcast %cst_90 : f32 to vector<8x6xf32>
    %c0_i32 = arith.constant 0 : i32
    %200 = vector.broadcast %c0_i32 : i32 to vector<1x6xi32>
    %201 = arith.cmpi eq, %198, %200 : vector<1x6xi32>
    %cst_91 = arith.constant 0.000000e+00 : f32
    %202 = vector.shape_cast %201 : vector<1x6xi1> to vector<1x6xi1>
    %203 = vector.broadcast %202 : vector<1x6xi1> to vector<8x6xi1>
    %204 = vector.shape_cast %150 : vector<8x1xf32> to vector<8x1xf32>
    %205 = vector.broadcast %204 : vector<8x1xf32> to vector<8x6xf32>
    %206 = vector.broadcast %cst_91 : f32 to vector<8x6xf32>
    %207 = arith.select %203, %205, %206 : vector<8x6xi1>, vector<8x6xf32>
    %208 = arith.addf %199, %207 : vector<8x6xf32>
    %c1_i32 = arith.constant 1 : i32
    %209 = vector.broadcast %c1_i32 : i32 to vector<1x6xi32>
    %210 = arith.cmpi eq, %198, %209 : vector<1x6xi32>
    %cst_92 = arith.constant 0.000000e+00 : f32
    %211 = vector.shape_cast %210 : vector<1x6xi1> to vector<1x6xi1>
    %212 = vector.broadcast %211 : vector<1x6xi1> to vector<8x6xi1>
    %213 = vector.shape_cast %151 : vector<8x1xf32> to vector<8x1xf32>
    %214 = vector.broadcast %213 : vector<8x1xf32> to vector<8x6xf32>
    %215 = vector.broadcast %cst_92 : f32 to vector<8x6xf32>
    %216 = arith.select %212, %214, %215 : vector<8x6xi1>, vector<8x6xf32>
    %217 = arith.addf %208, %216 : vector<8x6xf32>
    %c2_i32 = arith.constant 2 : i32
    %218 = vector.broadcast %c2_i32 : i32 to vector<1x6xi32>
    %219 = arith.cmpi eq, %198, %218 : vector<1x6xi32>
    %cst_93 = arith.constant 0.000000e+00 : f32
    %220 = vector.shape_cast %219 : vector<1x6xi1> to vector<1x6xi1>
    %221 = vector.broadcast %220 : vector<1x6xi1> to vector<8x6xi1>
    %222 = vector.shape_cast %152 : vector<8x1xf32> to vector<8x1xf32>
    %223 = vector.broadcast %222 : vector<8x1xf32> to vector<8x6xf32>
    %224 = vector.broadcast %cst_93 : f32 to vector<8x6xf32>
    %225 = arith.select %221, %223, %224 : vector<8x6xi1>, vector<8x6xf32>
    %226 = arith.addf %217, %225 : vector<8x6xf32>
    %c3_i32 = arith.constant 3 : i32
    %227 = vector.broadcast %c3_i32 : i32 to vector<1x6xi32>
    %228 = arith.cmpi eq, %198, %227 : vector<1x6xi32>
    %cst_94 = arith.constant 0.000000e+00 : f32
    %229 = vector.shape_cast %228 : vector<1x6xi1> to vector<1x6xi1>
    %230 = vector.broadcast %229 : vector<1x6xi1> to vector<8x6xi1>
    %231 = vector.shape_cast %153 : vector<8x1xf32> to vector<8x1xf32>
    %232 = vector.broadcast %231 : vector<8x1xf32> to vector<8x6xf32>
    %233 = vector.broadcast %cst_94 : f32 to vector<8x6xf32>
    %234 = arith.select %230, %232, %233 : vector<8x6xi1>, vector<8x6xf32>
    %235 = arith.addf %226, %234 : vector<8x6xf32>
    %c4_i32 = arith.constant 4 : i32
    %236 = vector.broadcast %c4_i32 : i32 to vector<1x6xi32>
    %237 = arith.cmpi eq, %198, %236 : vector<1x6xi32>
    %cst_95 = arith.constant 0.000000e+00 : f32
    %238 = vector.shape_cast %237 : vector<1x6xi1> to vector<1x6xi1>
    %239 = vector.broadcast %238 : vector<1x6xi1> to vector<8x6xi1>
    %240 = vector.shape_cast %154 : vector<8x1xf32> to vector<8x1xf32>
    %241 = vector.broadcast %240 : vector<8x1xf32> to vector<8x6xf32>
    %242 = vector.broadcast %cst_95 : f32 to vector<8x6xf32>
    %243 = arith.select %239, %241, %242 : vector<8x6xi1>, vector<8x6xf32>
    %244 = arith.addf %235, %243 : vector<8x6xf32>
    %c5_i32 = arith.constant 5 : i32
    %245 = vector.broadcast %c5_i32 : i32 to vector<1x6xi32>
    %246 = arith.cmpi eq, %198, %245 : vector<1x6xi32>
    %cst_96 = arith.constant 0.000000e+00 : f32
    %247 = vector.shape_cast %246 : vector<1x6xi1> to vector<1x6xi1>
    %248 = vector.broadcast %247 : vector<1x6xi1> to vector<8x6xi1>
    %249 = vector.shape_cast %155 : vector<8x1xf32> to vector<8x1xf32>
    %250 = vector.broadcast %249 : vector<8x1xf32> to vector<8x6xf32>
    %251 = vector.broadcast %cst_96 : f32 to vector<8x6xf32>
    %252 = arith.select %248, %250, %251 : vector<8x6xi1>, vector<8x6xf32>
    %253 = arith.addf %244, %252 : vector<8x6xf32>
    %c0_97 = arith.constant 0 : index
    %c0_98 = arith.constant 0 : index
    %254 = vector.load %arg19[%c0_97, %c0_98] : memref<8x6xf32, #tpu.memory_space<vmem>>, vector<8x6xf32>
    tpu.vector_store %arg19[%c0_97, %c0_98], %253 {strides = array<i32>} : memref<8x6xf32, #tpu.memory_space<vmem>>, vector<8x6xf32>,
    return
  }
  func.func @transform_0(%arg0: i32) -> (i32, i32) {
    %c0_i32 = arith.constant 0 : i32
    %c0_i32_0 = arith.constant 0 : i32
    return %arg0, %c0_i32 : i32, i32
  }
  func.func @transform_1(%arg0: i32) -> (i32, i32) {
    %c0_i32 = arith.constant 0 : i32
    %c0_i32_0 = arith.constant 0 : i32
    return %arg0, %c0_i32 : i32, i32
  }
  func.func @transform_2(%arg0: i32) -> (i32, i32) {
    %c0_i32 = arith.constant 0 : i32
    %c0_i32_0 = arith.constant 0 : i32
    return %arg0, %c0_i32 : i32, i32
  }
  func.func @transform_3(%arg0: i32) -> (i32, i32) {
    %c0_i32 = arith.constant 0 : i32
    %c0_i32_0 = arith.constant 0 : i32
    return %arg0, %c0_i32 : i32, i32
  }
  func.func @transform_4(%arg0: i32) -> (i32, i32) {
    %c0_i32 = arith.constant 0 : i32
    %c0_i32_0 = arith.constant 0 : i32
    return %arg0, %c0_i32 : i32, i32
  }
  func.func @transform_5(%arg0: i32) -> (i32, i32) {
    %c0_i32 = arith.constant 0 : i32
    %c0_i32_0 = arith.constant 0 : i32
    return %arg0, %c0_i32 : i32, i32
  }
  func.func @transform_6(%arg0: i32) -> (i32, i32) {
    %c0_i32 = arith.constant 0 : i32
    %c0_i32_0 = arith.constant 0 : i32
    return %arg0, %c0_i32 : i32, i32
  }
  func.func @transform_7(%arg0: i32) -> (i32, i32) {
    %c0_i32 = arith.constant 0 : i32
    %c0_i32_0 = arith.constant 0 : i32
    %c0_i32_1 = arith.constant 0 : i32
    return %c0_i32, %c0_i32_0 : i32, i32
  }
  func.func @transform_8(%arg0: i32) -> (i32, i32) {
    %c0_i32 = arith.constant 0 : i32
    %c0_i32_0 = arith.constant 0 : i32
    %c0_i32_1 = arith.constant 0 : i32
    return %c0_i32, %c0_i32_0 : i32, i32
  }
  func.func @transform_9(%arg0: i32) -> (i32, i32) {
    %c0_i32 = arith.constant 0 : i32
    %c0_i32_0 = arith.constant 0 : i32
    %c0_i32_1 = arith.constant 0 : i32
    return %c0_i32, %c0_i32_0 : i32, i32
  }
  func.func @transform_10(%arg0: i32) -> (i32, i32) {
    %c0_i32 = arith.constant 0 : i32
    %c0_i32_0 = arith.constant 0 : i32
    %c0_i32_1 = arith.constant 0 : i32
    return %c0_i32, %c0_i32_0 : i32, i32
  }
  func.func @transform_11(%arg0: i32) -> (i32, i32) {
    %c0_i32 = arith.constant 0 : i32
    %c0_i32_0 = arith.constant 0 : i32
    %c0_i32_1 = arith.constant 0 : i32
    return %c0_i32, %c0_i32_0 : i32, i32
  }
  func.func @transform_12(%arg0: i32) -> (i32, i32) {
    %c0_i32 = arith.constant 0 : i32
    %c0_i32_0 = arith.constant 0 : i32
    %c0_i32_1 = arith.constant 0 : i32
    return %c0_i32, %c0_i32_0 : i32, i32
  }
  func.func @transform_13(%arg0: i32) -> (i32, i32) {
    %c0_i32 = arith.constant 0 : i32
    %c0_i32_0 = arith.constant 0 : i32
    %c0_i32_1 = arith.constant 0 : i32
    return %c0_i32, %c0_i32_0 : i32, i32
  }
  func.func @transform_14(%arg0: i32) -> (i32, i32) {
    %c0_i32 = arith.constant 0 : i32
    %c0_i32_0 = arith.constant 0 : i32
    %c0_i32_1 = arith.constant 0 : i32
    return %c0_i32, %c0_i32_0 : i32, i32
  }
  func.func @transform_15(%arg0: i32) -> (i32, i32) {
    %c0_i32 = arith.constant 0 : i32
    %c0_i32_0 = arith.constant 0 : i32
    %c0_i32_1 = arith.constant 0 : i32
    return %c0_i32, %c0_i32_0 : i32, i32
  }
  func.func @transform_16(%arg0: i32) -> (i32, i32) {
    %c0_i32 = arith.constant 0 : i32
    %c0_i32_0 = arith.constant 0 : i32
    return %arg0, %c0_i32 : i32, i32
  }
  func.func @transform_17(%arg0: i32) -> (i32, i32) {
    %c0_i32 = arith.constant 0 : i32
    %c0_i32_0 = arith.constant 0 : i32
    return %arg0, %c0_i32 : i32, i32
  }
  func.func @transform_18(%arg0: i32) -> (i32, i32) {
    %c0_i32 = arith.constant 0 : i32
    %c0_i32_0 = arith.constant 0 : i32
    return %arg0, %c0_i32 : i32, i32
  }
}

</mosaic_0001>

<llo_original>
// kernel: tpu_custom_call.1
$region0: #{tpu_custom_call.1}
  #allocation0 [shape = 'u32[]', space=smem, size = 0x4, offset = 0x4, fixed_abs, tag = 'smem constant byte address 0x4 - core index']
  #allocation1 [shape = 'u32[144,128]{1,0:T(1,128)}', space=vmem, size = 0x12000, scoped, tag = 'internal scratch']
  #allocation2 [shape = 'f32[1,1]{1,0:T(1,128)S(6)}', space=smem, size = 0x200, scoped, tag = 'scoped memory for tpu_custom_call.1']
  %s0 = inlined_call_operand.vmem [shape: f32[8,128], index: 0, kind: input, shape index: {}]
  %s1 = inlined_call_operand.vmem [shape: f32[8,128], index: 1, kind: input, shape index: {}]
  %s2 = inlined_call_operand.vmem [shape: f32[8,128], index: 2, kind: input, shape index: {}]
  %s3 = inlined_call_operand.hbm [shape: f32[8,128], index: 3, kind: input, shape index: {}]
  %s4 = inlined_call_operand.hbm [shape: f32[8,128], index: 4, kind: input, shape index: {}]
  %s5 = inlined_call_operand.hbm [shape: f32[8,128], index: 5, kind: input, shape index: {}]
  %s6 = inlined_call_operand.hbm [shape: f32[8,128], index: 6, kind: input, shape index: {}]
  %s7 = inlined_call_operand.hbm [shape: f32[128,256], index: 7, kind: input, shape index: {}]
  %s8 = inlined_call_operand.vmem [shape: f32[128,128], index: 8, kind: input, shape index: {}]
  %s9 = inlined_call_operand.vmem [shape: f32[1,128], index: 9, kind: input, shape index: {}]
  %s10 = inlined_call_operand.hbm [shape: f32[1,128], index: 10, kind: input, shape index: {}]
  %s11 = inlined_call_operand.<no memory space> [shape: f32[1,1], index: 11, kind: input, shape index: {}]
  %s12 = inlined_call_operand.hbm [shape: f32[128,128], index: 12, kind: input, shape index: {}]
  %s13 = inlined_call_operand.hbm [shape: f32[1,128], index: 13, kind: input, shape index: {}]
  %s14 = inlined_call_operand.vmem [shape: f32[128,10], index: 14, kind: input, shape index: {}]
  %s15 = inlined_call_operand.vmem [shape: f32[1,10], index: 15, kind: input, shape index: {}]
  %s16 = inlined_call_operand.hbm [shape: f32[8,256], index: 16, kind: output, shape index: {0}]
  %s17 = inlined_call_operand.hbm [shape: f32[8,10], index: 17, kind: output, shape index: {1}]
  %s18 = inlined_call_operand.hbm [shape: f32[8,6], index: 18, kind: output, shape index: {2}]
  %19 = xla_tuple %s16, %s17, %s18
  %s20 = sld [smem:[#allocation0]]
  $region122: #{tpu_custom_call.1} parent=0
    _
  %s22 = ssub.s32 1, %s20
  %s23 = scalar_select 0, %s22, %s20
  %24 = sst [smem:[#allocation2]] %s11
  $region1: #{tpu_custom_call.1} parent=0
    #allocation3 [shape = 'u8[4096]{0}', space=vmem, size = 0x1000, scoped, tag = 'input window, operand 3, single buffered']
    #allocation4 [shape = 's32[1]{0}', space=sflag, size = 0x4, scoped, tag = 'scoped memory for tpu_custom_call.1']
    #allocation5 [shape = 's32[1]{0}', space=sflag, size = 0x4, scoped, tag = 'scoped memory for tpu_custom_call.1']
    #allocation6 [shape = 'u8[4096]{0}', space=vmem, size = 0x1000, scoped, tag = 'input window, operand 4, single buffered']
    #allocation7 [shape = 's32[1]{0}', space=sflag, size = 0x4, scoped, tag = 'scoped memory for tpu_custom_call.1']
    #allocation8 [shape = 'u8[4096]{0}', space=vmem, size = 0x1000, scoped, tag = 'input window, operand 5, single buffered']
    #allocation9 [shape = 'u8[4096]{0}', space=vmem, size = 0x1000, scoped, tag = 'input window, operand 6, single buffered']
    #allocation10 [shape = 's32[1]{0}', space=sflag, size = 0x4, scoped, tag = 'scoped memory for tpu_custom_call.1']
    #allocation11 [shape = 'u8[131072]{0}', space=vmem, size = 0x20000, scoped, tag = 'input window, operand 7, single buffered']
    #allocation12 [shape = 'u8[512]{0}', space=vmem, size = 0x400, scoped, tag = 'input window, operand 10, single buffered']
    #allocation13 [shape = 's32[1]{0}', space=sflag, size = 0x4, scoped, tag = 'scoped memory for tpu_custom_call.1']
    #allocation14 [shape = 'u8[65536]{0}', space=vmem, size = 0x10000, scoped, tag = 'input window, operand 12, single buffered']
    #allocation15 [shape = 'u8[512]{0}', space=vmem, size = 0x400, scoped, tag = 'input window, operand 13, single buffered']
    #allocation16 [shape = 's32[1]{0}', space=sflag, size = 0x4, scoped, tag = 'scoped memory for tpu_custom_call.1']
    #allocation17 [shape = 'u8[8192]{0}', space=vmem, size = 0x2000, scoped, tag = 'output window, operand 0, single buffered']
    #allocation18 [shape = 'u8[4096]{0}', space=vmem, size = 0x1000, scoped, tag = 'output window, operand 1, single buffered']
    #allocation19 [shape = 's32[1]{0}', space=sflag, size = 0x4, scoped, tag = 'scoped memory for tpu_custom_call.1']
    #allocation20 [shape = 'u8[4096]{0}', space=vmem, size = 0x1000, scoped, tag = 'output window, operand 2, single buffered']
    %25 = vsyncpa [#allocation4], 0
    %26 = vsyncpa [#allocation7], 0
    %27 = vsyncpa [#allocation10], 0
    %28 = vsyncpa [#allocation13], 0
    %29 = vsyncpa [#allocation16], 0
    %30 = vsyncpa [#allocation5], 0
    %31 = vsyncpa [#allocation19], 0
    // Predicated region
    $region2: #{tpu_custom_call.1} parent=1 // pred_check
      _
    $region3: #{tpu_custom_call.1} parent=1 // pred_check_branch
      %33 = sbr.rel (0) target = $region5
    $region4: #{tpu_custom_call.1} parent=1 // pred_region
      _
    $region5: #{tpu_custom_call.1} parent=1 // pred_fallthru
      _
    // Predicated region
    $region6: #{tpu_custom_call.1} parent=1 // pred_check
      _
    $region7: #{tpu_custom_call.1} parent=1 // pred_check_branch
      %35 = sbr.rel (0) target = $region9
    $region8: #{tpu_custom_call.1} parent=1 // pred_region
      _
    $region9: #{tpu_custom_call.1} parent=1 // pred_fallthru
      _
    // Predicated region
    $region10: #{tpu_custom_call.1} parent=1 // pred_check
      _
    $region11: #{tpu_custom_call.1} parent=1 // pred_check_branch
      %37 = sbr.rel (0) target = $region13
    $region12: #{tpu_custom_call.1} parent=1 // pred_region
      _
    $region13: #{tpu_custom_call.1} parent=1 // pred_fallthru
      _
    // Predicated region
    $region14: #{tpu_custom_call.1} parent=1 // pred_check
      _
    $region15: #{tpu_custom_call.1} parent=1 // pred_check_branch
      %39 = sbr.rel (0) target = $region17
    $region16: #{tpu_custom_call.1} parent=1 // pred_region
      %s41 = ssub.s32 128, 128
      %42 = vsyncadd [#allocation4], %s41
      %s44 = sshll.u32 [#allocation3], 4
      %s45 = int_to_ptr.vmem [resolvable:$true] %s44
      %47 = dma.hbm_to_vmem [thread:$0]  %s3, 128, %s45, [#allocation4]
    $region17: #{tpu_custom_call.1} parent=1 // pred_fallthru
      _
    // Predicated region
    $region18: #{tpu_custom_call.1} parent=1 // pred_check
      _
    $region19: #{tpu_custom_call.1} parent=1 // pred_check_branch
      %49 = sbr.rel (0) target = $region21
    $region20: #{tpu_custom_call.1} parent=1 // pred_region
      %s51 = ssub.s32 128, 128
      %52 = vsyncadd [#allocation7], %s51
      %s54 = sshll.u32 [#allocation6], 4
      %s55 = int_to_ptr.vmem [resolvable:$true] %s54
      %57 = dma.hbm_to_vmem [thread:$0]  %s4, 128, %s55, [#allocation7]
    $region21: #{tpu_custom_call.1} parent=1 // pred_fallthru
      _
    // Predicated region
    $region22: #{tpu_custom_call.1} parent=1 // pred_check
      _
    $region23: #{tpu_custom_call.1} parent=1 // pred_check_branch
      %59 = sbr.rel (0) target = $region25
    $region24: #{tpu_custom_call.1} parent=1 // pred_region
      %s61 = ssub.s32 128, 128
      %62 = vsyncadd [#allocation7], %s61
      %s64 = sshll.u32 [#allocation8], 4
      %s65 = int_to_ptr.vmem [resolvable:$true] %s64
      %67 = dma.hbm_to_vmem [thread:$0]  %s5, 128, %s65, [#allocation7]
    $region25: #{tpu_custom_call.1} parent=1 // pred_fallthru
      _
    // Predicated region
    $region26: #{tpu_custom_call.1} parent=1 // pred_check
      _
    $region27: #{tpu_custom_call.1} parent=1 // pred_check_branch
      %69 = sbr.rel (0) target = $region29
    $region28: #{tpu_custom_call.1} parent=1 // pred_region
      %s71 = ssub.s32 128, 128
      %72 = vsyncadd [#allocation10], %s71
      %s74 = sshll.u32 [#allocation9], 4
      %s75 = int_to_ptr.vmem [resolvable:$true] %s74
      %77 = dma.hbm_to_vmem [thread:$0]  %s6, 128, %s75, [#allocation10]
    $region29: #{tpu_custom_call.1} parent=1 // pred_fallthru
      _
    // Predicated region
    $region30: #{tpu_custom_call.1} parent=1 // pred_check
      _
    $region31: #{tpu_custom_call.1} parent=1 // pred_check_branch
      %79 = sbr.rel (0) target = $region33
    $region32: #{tpu_custom_call.1} parent=1 // pred_region
      %s81 = ssub.s32 4096, 4096
      %82 = vsyncadd [#allocation10], %s81
      %s83 = sshll.u32 [#allocation11], 4
      %s84 = int_to_ptr.vmem [resolvable:$true] %s83
      %89 = dma.hbm_to_vmem [thread:$0]  %s7, 4096, %s84, [#allocation10], 256, 256, 16
    $region33: #{tpu_custom_call.1} parent=1 // pred_fallthru
      _
    // Predicated region
    $region34: #{tpu_custom_call.1} parent=1 // pred_check
      _
    $region35: #{tpu_custom_call.1} parent=1 // pred_check_branch
      %91 = sbr.rel (0) target = $region37
    $region36: #{tpu_custom_call.1} parent=1 // pred_region
      _
    $region37: #{tpu_custom_call.1} parent=1 // pred_fallthru
      _
    // Predicated region
    $region38: #{tpu_custom_call.1} parent=1 // pred_check
      _
    $region39: #{tpu_custom_call.1} parent=1 // pred_check_branch
      %93 = sbr.rel (0) target = $region41
    $region40: #{tpu_custom_call.1} parent=1 // pred_region
      _
    $region41: #{tpu_custom_call.1} parent=1 // pred_fallthru
      _
    // Predicated region
    $region42: #{tpu_custom_call.1} parent=1 // pred_check
      _
    $region43: #{tpu_custom_call.1} parent=1 // pred_check_branch
      %95 = sbr.rel (0) target = $region45
    $region44: #{tpu_custom_call.1} parent=1 // pred_region
      %s97 = ssub.s32 16, 16
      %98 = vsyncadd [#allocation13], %s97
      %s100 = sshll.u32 [#allocation12], 4
      %s101 = int_to_ptr.vmem [resolvable:$true] %s100
      %103 = dma.hbm_to_vmem [thread:$0]  %s10, 16, %s101, [#allocation13]
    $region45: #{tpu_custom_call.1} parent=1 // pred_fallthru
      _
    // Predicated region
    $region46: #{tpu_custom_call.1} parent=1 // pred_check
      _
    $region47: #{tpu_custom_call.1} parent=1 // pred_check_branch
      %105 = sbr.rel (0) target = $region49
    $region48: #{tpu_custom_call.1} parent=1 // pred_region
      _
    $region49: #{tpu_custom_call.1} parent=1 // pred_fallthru
      _
    // Predicated region
    $region50: #{tpu_custom_call.1} parent=1 // pred_check
      _
    $region51: #{tpu_custom_call.1} parent=1 // pred_check_branch
      %107 = sbr.rel (0) target = $region53
    $region52: #{tpu_custom_call.1} parent=1 // pred_region
      %s109 = ssub.s32 2048, 2048
      %110 = vsyncadd [#allocation13], %s109
      %s111 = sshll.u32 [#allocation14], 4
      %s112 = int_to_ptr.vmem [resolvable:$true] %s111
      %117 = dma.hbm_to_vmem [thread:$0]  %s12, 2048, %s112, [#allocation13], 128, 128, 8
    $region53: #{tpu_custom_call.1} parent=1 // pred_fallthru
      _
    // Predicated region
    $region54: #{tpu_custom_call.1} parent=1 // pred_check
      _
    $region55: #{tpu_custom_call.1} parent=1 // pred_check_branch
      %119 = sbr.rel (0) target = $region57
    $region56: #{tpu_custom_call.1} parent=1 // pred_region
      %s121 = ssub.s32 16, 16
      %122 = vsyncadd [#allocation16], %s121
      %s124 = sshll.u32 [#allocation15], 4
      %s125 = int_to_ptr.vmem [resolvable:$true] %s124
      %127 = dma.hbm_to_vmem [thread:$0]  %s13, 16, %s125, [#allocation16]
    $region57: #{tpu_custom_call.1} parent=1 // pred_fallthru
      _
    // Predicated region
    $region58: #{tpu_custom_call.1} parent=1 // pred_check
      _
    $region59: #{tpu_custom_call.1} parent=1 // pred_check_branch
      %129 = sbr.rel (0) target = $region61
    $region60: #{tpu_custom_call.1} parent=1 // pred_region
      _
    $region61: #{tpu_custom_call.1} parent=1 // pred_fallthru
      _
    // Predicated region
    $region62: #{tpu_custom_call.1} parent=1 // pred_check
      _
    $region63: #{tpu_custom_call.1} parent=1 // pred_check_branch
      %131 = sbr.rel (0) target = $region65
    $region64: #{tpu_custom_call.1} parent=1 // pred_region
      _
    $region65: #{tpu_custom_call.1} parent=1 // pred_fallthru
      _
    // Predicated region
    $region66: #{tpu_custom_call.1} parent=1 // pred_check
      _
    $region67: #{tpu_custom_call.1} parent=1 // pred_check_branch
      %133 = sbr.rel (0) target = $region69
    $region68: #{tpu_custom_call.1} parent=1 // pred_region
      %134 = dma.done [#allocation4], 128
    $region69: #{tpu_custom_call.1} parent=1 // pred_fallthru
      _
    // Predicated region
    $region70: #{tpu_custom_call.1} parent=1 // pred_check
      _
    $region71: #{tpu_custom_call.1} parent=1 // pred_check_branch
      %136 = sbr.rel (0) target = $region73
    $region72: #{tpu_custom_call.1} parent=1 // pred_region
      %137 = dma.done [#allocation7], 128
    $region73: #{tpu_custom_call.1} parent=1 // pred_fallthru
      _
    // Predicated region
    $region74: #{tpu_custom_call.1} parent=1 // pred_check
      _
    $region75: #{tpu_custom_call.1} parent=1 // pred_check_branch
      %139 = sbr.rel (0) target = $region77
    $region76: #{tpu_custom_call.1} parent=1 // pred_region
      %140 = dma.done [#allocation7], 128
    $region77: #{tpu_custom_call.1} parent=1 // pred_fallthru
      _
    // Predicated region
    $region78: #{tpu_custom_call.1} parent=1 // pred_check
      _
    $region79: #{tpu_custom_call.1} parent=1 // pred_check_branch
      %142 = sbr.rel (0) target = $region81
    $region80: #{tpu_custom_call.1} parent=1 // pred_region
      %143 = dma.done [#allocation10], 128
    $region81: #{tpu_custom_call.1} parent=1 // pred_fallthru
      _
    // Predicated region
    $region82: #{tpu_custom_call.1} parent=1 // pred_check
      _
    $region83: #{tpu_custom_call.1} parent=1 // pred_check_branch
      %145 = sbr.rel (0) target = $region85
    $region84: #{tpu_custom_call.1} parent=1 // pred_region
      %146 = dma.done [#allocation10], 4096
    $region85: #{tpu_custom_call.1} parent=1 // pred_fallthru
      _
    // Predicated region
    $region86: #{tpu_custom_call.1} parent=1 // pred_check
      _
    $region87: #{tpu_custom_call.1} parent=1 // pred_check_branch
      %148 = sbr.rel (0) target = $region89
    $region88: #{tpu_custom_call.1} parent=1 // pred_region
      %149 = dma.done [#allocation13], 16
    $region89: #{tpu_custom_call.1} parent=1 // pred_fallthru
      _
    // Predicated region
    $region90: #{tpu_custom_call.1} parent=1 // pred_check
      _
    $region91: #{tpu_custom_call.1} parent=1 // pred_check_branch
      %151 = sbr.rel (0) target = $region93
    $region92: #{tpu_custom_call.1} parent=1 // pred_region
      %152 = dma.done [#allocation13], 2048
    $region93: #{tpu_custom_call.1} parent=1 // pred_fallthru
      _
    // Predicated region
    $region94: #{tpu_custom_call.1} parent=1 // pred_check
      _
    $region95: #{tpu_custom_call.1} parent=1 // pred_check_branch
      %154 = sbr.rel (0) target = $region97
    $region96: #{tpu_custom_call.1} parent=1 // pred_region
      %155 = dma.done [#allocation16], 16
    $region97: #{tpu_custom_call.1} parent=1 // pred_fallthru
      _
    %v156 = vld [vmem:[%s0] sm:$0xff]
    %v157 = vld [vmem:[#allocation11] sm:$0xff]
    %v158 = vld [vmem:[#allocation11 + $0x8] sm:$0xff]
    %v159 = vld [vmem:[#allocation11 + $0x10] sm:$0xff]
    %v160 = vld [vmem:[#allocation11 + $0x18] sm:$0xff]
    %v161 = vld [vmem:[#allocation11 + $0x20] sm:$0xff]
    %v162 = vld [vmem:[#allocation11 + $0x28] sm:$0xff]
    %v163 = vld [vmem:[#allocation11 + $0x30] sm:$0xff]
    %v164 = vld [vmem:[#allocation11 + $0x38] sm:$0xff]
    %v165 = vld [vmem:[#allocation11 + $0x40] sm:$0xff]
    %v166 = vld [vmem:[#allocation11 + $0x48] sm:$0xff]
    %v167 = vld [vmem:[#allocation11 + $0x50] sm:$0xff]
    %v168 = vld [vmem:[#allocation11 + $0x58] sm:$0xff]
    %v169 = vld [vmem:[#allocation11 + $0x60] sm:$0xff]
    %v170 = vld [vmem:[#allocation11 + $0x68] sm:$0xff]
    %v171 = vld [vmem:[#allocation11 + $0x70] sm:$0xff]
    %v172 = vld [vmem:[#allocation11 + $0x78] sm:$0xff]
    %v173 = vld [vmem:[#allocation11 + $0x80] sm:$0xff]
    %v174 = vld [vmem:[#allocation11 + $0x88] sm:$0xff]
    %v175 = vld [vmem:[#allocation11 + $0x90] sm:$0xff]
    %v176 = vld [vmem:[#allocation11 + $0x98] sm:$0xff]
    %v177 = vld [vmem:[#allocation11 + $0xa0] sm:$0xff]
    %v178 = vld [vmem:[#allocation11 + $0xa8] sm:$0xff]
    %v179 = vld [vmem:[#allocation11 + $0xb0] sm:$0xff]
    %v180 = vld [vmem:[#allocation11 + $0xb8] sm:$0xff]
    %v181 = vld [vmem:[#allocation11 + $0xc0] sm:$0xff]
    %v182 = vld [vmem:[#allocation11 + $0xc8] sm:$0xff]
    %v183 = vld [vmem:[#allocation11 + $0xd0] sm:$0xff]
    %v184 = vld [vmem:[#allocation11 + $0xd8] sm:$0xff]
    %v185 = vld [vmem:[#allocation11 + $0xe0] sm:$0xff]
    %v186 = vld [vmem:[#allocation11 + $0xe8] sm:$0xff]
    %v187 = vld [vmem:[#allocation11 + $0xf0] sm:$0xff]
    %v188 = vld [vmem:[#allocation11 + $0xf8] sm:$0xff]
    %189 = vmatprep.subr.mxu0 %v188
    %190 = vmatpush1.msra.mxu0 %v187
    %191 = vmatprep.subr.mxu0 %v186
    %192 = vmatpush1.msra.mxu0 %v185
    %193 = vmatprep.subr.mxu0 %v184
    %194 = vmatpush1.msra.mxu0 %v183
    %195 = vmatprep.subr.mxu0 %v182
    %196 = vmatpush1.msra.mxu0 %v181
    %197 = vmatprep.subr.mxu0 %v180
    %198 = vmatpush1.msra.mxu0 %v179
    %199 = vmatprep.subr.mxu0 %v178
    %200 = vmatpush1.msra.mxu0 %v177
    %201 = vmatprep.subr.mxu0 %v176
    %202 = vmatpush1.msra.mxu0 %v175
    %203 = vmatprep.subr.mxu0 %v174
    %204 = vmatpush1.msra.mxu0 %v173
    %205 = vmatprep.subr.mxu0 %v172
    %206 = vmatpush1.msra.mxu0 %v171
    %207 = vmatprep.subr.mxu0 %v170
    %208 = vmatpush1.msra.mxu0 %v169
    %209 = vmatprep.subr.mxu0 %v168
    %210 = vmatpush1.msra.mxu0 %v167
    %211 = vmatprep.subr.mxu0 %v166
    %212 = vmatpush1.msra.mxu0 %v165
    %213 = vmatprep.subr.mxu0 %v164
    %214 = vmatpush1.msra.mxu0 %v163
    %215 = vmatprep.subr.mxu0 %v162
    %216 = vmatpush1.msra.mxu0 %v161
    %217 = vmatprep.subr.mxu0 %v160
    %218 = vmatpush1.msra.mxu0 %v159
    %219 = vmatprep.subr.mxu0 %v158
    %220 = vmatpush1.msra.mxu0 %v157
    %221 = vmatprep.subr.mxu0 0.0
    %222 = vmatpush2.msra.mxu0 0.0
    %223 = vmatprep.subr.mxu0 0.0
    %224 = vmatpush2.msra.mxu0 0.0
    %225 = vmatprep.subr.mxu0 0.0
    %226 = vmatpush2.msra.mxu0 0.0
    %227 = vmatprep.subr.mxu0 0.0
    %228 = vmatpush2.msra.mxu0 0.0
    %229 = vmatprep.subr.mxu0 0.0
    %230 = vmatpush2.msra.mxu0 0.0
    %231 = vmatprep.subr.mxu0 0.0
    %232 = vmatpush2.msra.mxu0 0.0
    %233 = vmatprep.subr.mxu0 0.0
    %234 = vmatpush2.msra.mxu0 0.0
    %235 = vmatprep.subr.mxu0 0.0
    %236 = vmatpush2.msra.mxu0 0.0
    %237 = vmatprep.subr.mxu0 0.0
    %238 = vmatpush2.msra.mxu0 0.0
    %239 = vmatprep.subr.mxu0 0.0
    %240 = vmatpush2.msra.mxu0 0.0
    %241 = vmatprep.subr.mxu0 0.0
    %242 = vmatpush2.msra.mxu0 0.0
    %243 = vmatprep.subr.mxu0 0.0
    %244 = vmatpush2.msra.mxu0 0.0
    %245 = vmatprep.subr.mxu0 0.0
    %246 = vmatpush2.msra.mxu0 0.0
    %247 = vmatprep.subr.mxu0 0.0
    %248 = vmatpush2.msra.mxu0 0.0
    %249 = vmatprep.subr.mxu0 0.0
    %250 = vmatpush2.msra.mxu0 0.0
    %251 = vmatprep.subr.mxu0 0.0
    %252 = vmatpush2.msra.mxu0 0.0
    %253 = vmatprep.mubr.f32.mxu0 0.0
    %254 = vmatmul.mubr.f32.gmra.mxu0 %v156
    %v255 = vpop.f32.mrf.mxu0
    %v256 = vadd.f32 0.0, %v255
    %v257 = vpop.f32.mrf.mxu0
    %v258 = vadd.f32 0.0, %v257
    %259 = vdwg.mxu0
    %v260 = vld [vmem:[%s9] sm:$0x1]
    %v262 = vlaneseq
    %v263 = vshrl.u32 %v262, 7
    %v264 = vsub.s32 0, %v263
    %v265 = vrot.slane %v260, %v264
    %v267 = vadd.f32 %v256, %v265
    %v268 = vld [vmem:[%s8] sm:$0xff]
    %v269 = vld [vmem:[%s8 + $0x8] sm:$0xff]
    %v270 = vld [vmem:[%s8 + $0x10] sm:$0xff]
    %v271 = vld [vmem:[%s8 + $0x18] sm:$0xff]
    %v272 = vld [vmem:[%s8 + $0x20] sm:$0xff]
    %v273 = vld [vmem:[%s8 + $0x28] sm:$0xff]
    %v274 = vld [vmem:[%s8 + $0x30] sm:$0xff]
    %v275 = vld [vmem:[%s8 + $0x38] sm:$0xff]
    %v276 = vld [vmem:[%s8 + $0x40] sm:$0xff]
    %v277 = vld [vmem:[%s8 + $0x48] sm:$0xff]
    %v278 = vld [vmem:[%s8 + $0x50] sm:$0xff]
    %v279 = vld [vmem:[%s8 + $0x58] sm:$0xff]
    %v280 = vld [vmem:[%s8 + $0x60] sm:$0xff]
    %v281 = vld [vmem:[%s8 + $0x68] sm:$0xff]
    %v282 = vld [vmem:[%s8 + $0x70] sm:$0xff]
    %v283 = vld [vmem:[%s8 + $0x78] sm:$0xff]
    %v284 = vld [vmem:[#allocation12] sm:$0x1]
    %s285 = sld [smem:[#allocation2]]
    %v286 = vld [vmem:[%s1] sm:$0xff]
    %287 = vmatprep.subr.mxu0 0.0
    %288 = vmatpush1.msra.mxu0 %v283
    %289 = vmatprep.subr.mxu0 0.0
    %290 = vmatpush1.msra.mxu0 %v282
    %291 = vmatprep.subr.mxu0 0.0
    %292 = vmatpush1.msra.mxu0 %v281
    %293 = vmatprep.subr.mxu0 0.0
    %294 = vmatpush1.msra.mxu0 %v280
    %295 = vmatprep.subr.mxu0 0.0
    %296 = vmatpush1.msra.mxu0 %v279
    %297 = vmatprep.subr.mxu0 0.0
    %298 = vmatpush1.msra.mxu0 %v278
    %299 = vmatprep.subr.mxu0 0.0
    %300 = vmatpush1.msra.mxu0 %v277
    %301 = vmatprep.subr.mxu0 0.0
    %302 = vmatpush1.msra.mxu0 %v276
    %303 = vmatprep.subr.mxu0 0.0
    %304 = vmatpush1.msra.mxu0 %v275
    %305 = vmatprep.subr.mxu0 0.0
    %306 = vmatpush1.msra.mxu0 %v274
    %307 = vmatprep.subr.mxu0 0.0
    %308 = vmatpush1.msra.mxu0 %v273
    %309 = vmatprep.subr.mxu0 0.0
    %310 = vmatpush1.msra.mxu0 %v272
    %311 = vmatprep.subr.mxu0 0.0
    %312 = vmatpush1.msra.mxu0 %v271
    %313 = vmatprep.subr.mxu0 0.0
    %314 = vmatpush1.msra.mxu0 %v270
    %315 = vmatprep.subr.mxu0 0.0
    %316 = vmatpush1.msra.mxu0 %v269
    %317 = vmatprep.subr.mxu0 0.0
    %318 = vmatpush1.msra.mxu0 %v268
    %319 = vmatprep.subr.mxu0 0.0
    %320 = vmatpush2.msra.mxu0 0.0
    %321 = vmatprep.subr.mxu0 0.0
    %322 = vmatpush2.msra.mxu0 0.0
    %323 = vmatprep.subr.mxu0 0.0
    %324 = vmatpush2.msra.mxu0 0.0
    %325 = vmatprep.subr.mxu0 0.0
    %326 = vmatpush2.msra.mxu0 0.0
    %327 = vmatprep.subr.mxu0 0.0
    %328 = vmatpush2.msra.mxu0 0.0
    %329 = vmatprep.subr.mxu0 0.0
    %330 = vmatpush2.msra.mxu0 0.0
    %331 = vmatprep.subr.mxu0 0.0
    %332 = vmatpush2.msra.mxu0 0.0
    %333 = vmatprep.subr.mxu0 0.0
    %334 = vmatpush2.msra.mxu0 0.0
    %335 = vmatprep.subr.mxu0 0.0
    %336 = vmatpush2.msra.mxu0 0.0
    %337 = vmatprep.subr.mxu0 0.0
    %338 = vmatpush2.msra.mxu0 0.0
    %339 = vmatprep.subr.mxu0 0.0
    %340 = vmatpush2.msra.mxu0 0.0
    %341 = vmatprep.subr.mxu0 0.0
    %342 = vmatpush2.msra.mxu0 0.0
    %343 = vmatprep.subr.mxu0 0.0
    %344 = vmatpush2.msra.mxu0 0.0
    %345 = vmatprep.subr.mxu0 0.0
    %346 = vmatpush2.msra.mxu0 0.0
    %347 = vmatprep.subr.mxu0 0.0
    %348 = vmatpush2.msra.mxu0 0.0
    %349 = vmatprep.subr.mxu0 0.0
    %350 = vmatpush2.msra.mxu0 0.0
    %351 = vmatprep.mubr.f32.mxu0 0.0
    %352 = vmatmul.mubr.f32.gmra.mxu0 %v286
    %v353 = vpop.f32.mrf.mxu0
    %v354 = vadd.f32 %v267, %v353
    %v355 = vpop.f32.mrf.mxu0
    %356 = vdwg.mxu0
    %vm357 = vcmp.gt.f32.partialorder %v354, 0.0
    %v358 = vmul.f32 %v354, 0.01
    %v359 = vsel %vm357, %v354, %v358
    %v361 = vlaneseq
    %v362 = vshrl.u32 %v361, 7
    %v363 = vsub.s32 0, %v362
    %v364 = vrot.slane %v284, %v363
    %v366 = vmul.f32 %v359, %v364
    %367 = vadd.xlane.f32.xlu0 %v366
    %v368 = vpop.xlane.xlu0 %367
    %v369 = vstv %s285
    %v370 = vadd.f32 %v368, %v369
    %vm371 = vcmp.gt.f32.partialorder %v370, 0.0
    %v372 = vmul.f32 %v370, 0.01
    %v373 = vsel %vm371, %v370, %v372
    %v374 = vld [vmem:[%s2] sm:$0xff]
    %375 = vmatprep.subr.mxu0 0.0
    %376 = vmatpush1.msra.mxu0 %v283
    %377 = vmatprep.subr.mxu0 0.0
    %378 = vmatpush1.msra.mxu0 %v282
    %379 = vmatprep.subr.mxu0 0.0
    %380 = vmatpush1.msra.mxu0 %v281
    %381 = vmatprep.subr.mxu0 0.0
    %382 = vmatpush1.msra.mxu0 %v280
    %383 = vmatprep.subr.mxu0 0.0
    %384 = vmatpush1.msra.mxu0 %v279
    %385 = vmatprep.subr.mxu0 0.0
    %386 = vmatpush1.msra.mxu0 %v278
    %387 = vmatprep.subr.mxu0 0.0
    %388 = vmatpush1.msra.mxu0 %v277
    %389 = vmatprep.subr.mxu0 0.0
    %390 = vmatpush1.msra.mxu0 %v276
    %391 = vmatprep.subr.mxu0 0.0
    %392 = vmatpush1.msra.mxu0 %v275
    %393 = vmatprep.subr.mxu0 0.0
    %394 = vmatpush1.msra.mxu0 %v274
    %395 = vmatprep.subr.mxu0 0.0
    %396 = vmatpush1.msra.mxu0 %v273
    %397 = vmatprep.subr.mxu0 0.0
    %398 = vmatpush1.msra.mxu0 %v272
    %399 = vmatprep.subr.mxu0 0.0
    %400 = vmatpush1.msra.mxu0 %v271
    %401 = vmatprep.subr.mxu0 0.0
    %402 = vmatpush1.msra.mxu0 %v270
    %403 = vmatprep.subr.mxu0 0.0
    %404 = vmatpush1.msra.mxu0 %v269
    %405 = vmatprep.subr.mxu0 0.0
    %406 = vmatpush1.msra.mxu0 %v268
    %407 = vmatprep.subr.mxu0 0.0
    %408 = vmatpush2.msra.mxu0 0.0
    %409 = vmatprep.subr.mxu0 0.0
    %410 = vmatpush2.msra.mxu0 0.0
    %411 = vmatprep.subr.mxu0 0.0
    %412 = vmatpush2.msra.mxu0 0.0
    %413 = vmatprep.subr.mxu0 0.0
    %414 = vmatpush2.msra.mxu0 0.0
    %415 = vmatprep.subr.mxu0 0.0
    %416 = vmatpush2.msra.mxu0 0.0
    %417 = vmatprep.subr.mxu0 0.0
    %418 = vmatpush2.msra.mxu0 0.0
    %419 = vmatprep.subr.mxu0 0.0
    %420 = vmatpush2.msra.mxu0 0.0
    %421 = vmatprep.subr.mxu0 0.0
    %422 = vmatpush2.msra.mxu0 0.0
    %423 = vmatprep.subr.mxu0 0.0
    %424 = vmatpush2.msra.mxu0 0.0
    %425 = vmatprep.subr.mxu0 0.0
    %426 = vmatpush2.msra.mxu0 0.0
    %427 = vmatprep.subr.mxu0 0.0
    %428 = vmatpush2.msra.mxu0 0.0
    %429 = vmatprep.subr.mxu0 0.0
    %430 = vmatpush2.msra.mxu0 0.0
    %431 = vmatprep.subr.mxu0 0.0
    %432 = vmatpush2.msra.mxu0 0.0
    %433 = vmatprep.subr.mxu0 0.0
    %434 = vmatpush2.msra.mxu0 0.0
    %435 = vmatprep.subr.mxu0 0.0
    %436 = vmatpush2.msra.mxu0 0.0
    %437 = vmatprep.subr.mxu0 0.0
    %438 = vmatpush2.msra.mxu0 0.0
    %439 = vmatprep.mubr.f32.mxu0 0.0
    %440 = vmatmul.mubr.f32.gmra.mxu0 %v374
    %v441 = vpop.f32.mrf.mxu0
    %v442 = vadd.f32 %v267, %v441
    %v443 = vpop.f32.mrf.mxu0
    %444 = vdwg.mxu0
    %vm445 = vcmp.gt.f32.partialorder %v442, 0.0
    %v446 = vmul.f32 %v442, 0.01
    %v447 = vsel %vm445, %v442, %v446
    %v448 = vmul.f32 %v447, %v364
    %449 = vadd.xlane.f32.xlu0 %v448
    %v450 = vpop.xlane.xlu0 %449
    %v451 = vadd.f32 %v450, %v369
    %vm452 = vcmp.gt.f32.partialorder %v451, 0.0
    %v453 = vmul.f32 %v451, 0.01
    %v454 = vsel %vm452, %v451, %v453
    %v455 = vld [vmem:[#allocation3] sm:$0xff]
    %456 = vmatprep.subr.mxu0 0.0
    %457 = vmatpush1.msra.mxu0 %v283
    %458 = vmatprep.subr.mxu0 0.0
    %459 = vmatpush1.msra.mxu0 %v282
    %460 = vmatprep.subr.mxu0 0.0
    %461 = vmatpush1.msra.mxu0 %v281
    %462 = vmatprep.subr.mxu0 0.0
    %463 = vmatpush1.msra.mxu0 %v280
    %464 = vmatprep.subr.mxu0 0.0
    %465 = vmatpush1.msra.mxu0 %v279
    %466 = vmatprep.subr.mxu0 0.0
    %467 = vmatpush1.msra.mxu0 %v278
    %468 = vmatprep.subr.mxu0 0.0
    %469 = vmatpush1.msra.mxu0 %v277
    %470 = vmatprep.subr.mxu0 0.0
    %471 = vmatpush1.msra.mxu0 %v276
    %472 = vmatprep.subr.mxu0 0.0
    %473 = vmatpush1.msra.mxu0 %v275
    %474 = vmatprep.subr.mxu0 0.0
    %475 = vmatpush1.msra.mxu0 %v274
    %476 = vmatprep.subr.mxu0 0.0
    %477 = vmatpush1.msra.mxu0 %v273
    %478 = vmatprep.subr.mxu0 0.0
    %479 = vmatpush1.msra.mxu0 %v272
    %480 = vmatprep.subr.mxu0 0.0
    %481 = vmatpush1.msra.mxu0 %v271
    %482 = vmatprep.subr.mxu0 0.0
    %483 = vmatpush1.msra.mxu0 %v270
    %484 = vmatprep.subr.mxu0 0.0
    %485 = vmatpush1.msra.mxu0 %v269
    %486 = vmatprep.subr.mxu0 0.0
    %487 = vmatpush1.msra.mxu0 %v268
    %488 = vmatprep.subr.mxu0 0.0
    %489 = vmatpush2.msra.mxu0 0.0
    %490 = vmatprep.subr.mxu0 0.0
    %491 = vmatpush2.msra.mxu0 0.0
    %492 = vmatprep.subr.mxu0 0.0
    %493 = vmatpush2.msra.mxu0 0.0
    %494 = vmatprep.subr.mxu0 0.0
    %495 = vmatpush2.msra.mxu0 0.0
    %496 = vmatprep.subr.mxu0 0.0
    %497 = vmatpush2.msra.mxu0 0.0
    %498 = vmatprep.subr.mxu0 0.0
    %499 = vmatpush2.msra.mxu0 0.0
    %500 = vmatprep.subr.mxu0 0.0
    %501 = vmatpush2.msra.mxu0 0.0
    %502 = vmatprep.subr.mxu0 0.0
    %503 = vmatpush2.msra.mxu0 0.0
    %504 = vmatprep.subr.mxu0 0.0
    %505 = vmatpush2.msra.mxu0 0.0
    %506 = vmatprep.subr.mxu0 0.0
    %507 = vmatpush2.msra.mxu0 0.0
    %508 = vmatprep.subr.mxu0 0.0
    %509 = vmatpush2.msra.mxu0 0.0
    %510 = vmatprep.subr.mxu0 0.0
    %511 = vmatpush2.msra.mxu0 0.0
    %512 = vmatprep.subr.mxu0 0.0
    %513 = vmatpush2.msra.mxu0 0.0
    %514 = vmatprep.subr.mxu0 0.0
    %515 = vmatpush2.msra.mxu0 0.0
    %516 = vmatprep.subr.mxu0 0.0
    %517 = vmatpush2.msra.mxu0 0.0
    %518 = vmatprep.subr.mxu0 0.0
    %519 = vmatpush2.msra.mxu0 0.0
    %520 = vmatprep.mubr.f32.mxu0 0.0
    %521 = vmatmul.mubr.f32.gmra.mxu0 %v455
    %v522 = vpop.f32.mrf.mxu0
    %v523 = vadd.f32 %v267, %v522
    %v524 = vpop.f32.mrf.mxu0
    %525 = vdwg.mxu0
    %vm526 = vcmp.gt.f32.partialorder %v523, 0.0
    %v527 = vmul.f32 %v523, 0.01
    %v528 = vsel %vm526, %v523, %v527
    %v529 = vmul.f32 %v528, %v364
    %530 = vadd.xlane.f32.xlu0 %v529
    %v531 = vpop.xlane.xlu0 %530
    %v532 = vadd.f32 %v531, %v369
    %vm533 = vcmp.gt.f32.partialorder %v532, 0.0
    %v534 = vmul.f32 %v532, 0.01
    %v535 = vsel %vm533, %v532, %v534
    %v536 = vld [vmem:[#allocation6] sm:$0xff]
    %537 = vmatprep.subr.mxu0 0.0
    %538 = vmatpush1.msra.mxu0 %v283
    %539 = vmatprep.subr.mxu0 0.0
    %540 = vmatpush1.msra.mxu0 %v282
    %541 = vmatprep.subr.mxu0 0.0
    %542 = vmatpush1.msra.mxu0 %v281
    %543 = vmatprep.subr.mxu0 0.0
    %544 = vmatpush1.msra.mxu0 %v280
    %545 = vmatprep.subr.mxu0 0.0
    %546 = vmatpush1.msra.mxu0 %v279
    %547 = vmatprep.subr.mxu0 0.0
    %548 = vmatpush1.msra.mxu0 %v278
    %549 = vmatprep.subr.mxu0 0.0
    %550 = vmatpush1.msra.mxu0 %v277
    %551 = vmatprep.subr.mxu0 0.0
    %552 = vmatpush1.msra.mxu0 %v276
    %553 = vmatprep.subr.mxu0 0.0
    %554 = vmatpush1.msra.mxu0 %v275
    %555 = vmatprep.subr.mxu0 0.0
    %556 = vmatpush1.msra.mxu0 %v274
    %557 = vmatprep.subr.mxu0 0.0
    %558 = vmatpush1.msra.mxu0 %v273
    %559 = vmatprep.subr.mxu0 0.0
    %560 = vmatpush1.msra.mxu0 %v272
    %561 = vmatprep.subr.mxu0 0.0
    %562 = vmatpush1.msra.mxu0 %v271
    %563 = vmatprep.subr.mxu0 0.0
    %564 = vmatpush1.msra.mxu0 %v270
    %565 = vmatprep.subr.mxu0 0.0
    %566 = vmatpush1.msra.mxu0 %v269
    %567 = vmatprep.subr.mxu0 0.0
    %568 = vmatpush1.msra.mxu0 %v268
    %569 = vmatprep.subr.mxu0 0.0
    %570 = vmatpush2.msra.mxu0 0.0
    %571 = vmatprep.subr.mxu0 0.0
    %572 = vmatpush2.msra.mxu0 0.0
    %573 = vmatprep.subr.mxu0 0.0
    %574 = vmatpush2.msra.mxu0 0.0
    %575 = vmatprep.subr.mxu0 0.0
    %576 = vmatpush2.msra.mxu0 0.0
    %577 = vmatprep.subr.mxu0 0.0
    %578 = vmatpush2.msra.mxu0 0.0
    %579 = vmatprep.subr.mxu0 0.0
    %580 = vmatpush2.msra.mxu0 0.0
    %581 = vmatprep.subr.mxu0 0.0
    %582 = vmatpush2.msra.mxu0 0.0
    %583 = vmatprep.subr.mxu0 0.0
    %584 = vmatpush2.msra.mxu0 0.0
    %585 = vmatprep.subr.mxu0 0.0
    %586 = vmatpush2.msra.mxu0 0.0
    %587 = vmatprep.subr.mxu0 0.0
    %588 = vmatpush2.msra.mxu0 0.0
    %589 = vmatprep.subr.mxu0 0.0
    %590 = vmatpush2.msra.mxu0 0.0
    %591 = vmatprep.subr.mxu0 0.0
    %592 = vmatpush2.msra.mxu0 0.0
    %593 = vmatprep.subr.mxu0 0.0
    %594 = vmatpush2.msra.mxu0 0.0
    %595 = vmatprep.subr.mxu0 0.0
    %596 = vmatpush2.msra.mxu0 0.0
    %597 = vmatprep.subr.mxu0 0.0
    %598 = vmatpush2.msra.mxu0 0.0
    %599 = vmatprep.subr.mxu0 0.0
    %600 = vmatpush2.msra.mxu0 0.0
    %601 = vmatprep.mubr.f32.mxu0 0.0
    %602 = vmatmul.mubr.f32.gmra.mxu0 %v536
    %v603 = vpop.f32.mrf.mxu0
    %v604 = vadd.f32 %v267, %v603
    %v605 = vpop.f32.mrf.mxu0
    %606 = vdwg.mxu0
    %vm607 = vcmp.gt.f32.partialorder %v604, 0.0
    %v608 = vmul.f32 %v604, 0.01
    %v609 = vsel %vm607, %v604, %v608
    %v610 = vmul.f32 %v609, %v364
    %611 = vadd.xlane.f32.xlu0 %v610
    %v612 = vpop.xlane.xlu0 %611
    %v613 = vadd.f32 %v612, %v369
    %vm614 = vcmp.gt.f32.partialorder %v613, 0.0
    %v615 = vmul.f32 %v613, 0.01
    %v616 = vsel %vm614, %v613, %v615
    %v617 = vld [vmem:[#allocation8] sm:$0xff]
    %618 = vmatprep.subr.mxu0 0.0
    %619 = vmatpush1.msra.mxu0 %v283
    %620 = vmatprep.subr.mxu0 0.0
    %621 = vmatpush1.msra.mxu0 %v282
    %622 = vmatprep.subr.mxu0 0.0
    %623 = vmatpush1.msra.mxu0 %v281
    %624 = vmatprep.subr.mxu0 0.0
    %625 = vmatpush1.msra.mxu0 %v280
    %626 = vmatprep.subr.mxu0 0.0
    %627 = vmatpush1.msra.mxu0 %v279
    %628 = vmatprep.subr.mxu0 0.0
    %629 = vmatpush1.msra.mxu0 %v278
    %630 = vmatprep.subr.mxu0 0.0
    %631 = vmatpush1.msra.mxu0 %v277
    %632 = vmatprep.subr.mxu0 0.0
    %633 = vmatpush1.msra.mxu0 %v276
    %634 = vmatprep.subr.mxu0 0.0
    %635 = vmatpush1.msra.mxu0 %v275
    %636 = vmatprep.subr.mxu0 0.0
    %637 = vmatpush1.msra.mxu0 %v274
    %638 = vmatprep.subr.mxu0 0.0
    %639 = vmatpush1.msra.mxu0 %v273
    %640 = vmatprep.subr.mxu0 0.0
    %641 = vmatpush1.msra.mxu0 %v272
    %642 = vmatprep.subr.mxu0 0.0
    %643 = vmatpush1.msra.mxu0 %v271
    %644 = vmatprep.subr.mxu0 0.0
    %645 = vmatpush1.msra.mxu0 %v270
    %646 = vmatprep.subr.mxu0 0.0
    %647 = vmatpush1.msra.mxu0 %v269
    %648 = vmatprep.subr.mxu0 0.0
    %649 = vmatpush1.msra.mxu0 %v268
    %650 = vmatprep.subr.mxu0 0.0
    %651 = vmatpush2.msra.mxu0 0.0
    %652 = vmatprep.subr.mxu0 0.0
    %653 = vmatpush2.msra.mxu0 0.0
    %654 = vmatprep.subr.mxu0 0.0
    %655 = vmatpush2.msra.mxu0 0.0
    %656 = vmatprep.subr.mxu0 0.0
    %657 = vmatpush2.msra.mxu0 0.0
    %658 = vmatprep.subr.mxu0 0.0
    %659 = vmatpush2.msra.mxu0 0.0
    %660 = vmatprep.subr.mxu0 0.0
    %661 = vmatpush2.msra.mxu0 0.0
    %662 = vmatprep.subr.mxu0 0.0
    %663 = vmatpush2.msra.mxu0 0.0
    %664 = vmatprep.subr.mxu0 0.0
    %665 = vmatpush2.msra.mxu0 0.0
    %666 = vmatprep.subr.mxu0 0.0
    %667 = vmatpush2.msra.mxu0 0.0
    %668 = vmatprep.subr.mxu0 0.0
    %669 = vmatpush2.msra.mxu0 0.0
    %670 = vmatprep.subr.mxu0 0.0
    %671 = vmatpush2.msra.mxu0 0.0
    %672 = vmatprep.subr.mxu0 0.0
    %673 = vmatpush2.msra.mxu0 0.0
    %674 = vmatprep.subr.mxu0 0.0
    %675 = vmatpush2.msra.mxu0 0.0
    %676 = vmatprep.subr.mxu0 0.0
    %677 = vmatpush2.msra.mxu0 0.0
    %678 = vmatprep.subr.mxu0 0.0
    %679 = vmatpush2.msra.mxu0 0.0
    %680 = vmatprep.subr.mxu0 0.0
    %681 = vmatpush2.msra.mxu0 0.0
    %682 = vmatprep.mubr.f32.mxu0 0.0
    %683 = vmatmul.mubr.f32.gmra.mxu0 %v617
    %v684 = vpop.f32.mrf.mxu0
    %v685 = vadd.f32 %v267, %v684
    %v686 = vpop.f32.mrf.mxu0
    %687 = vdwg.mxu0
    %vm688 = vcmp.gt.f32.partialorder %v685, 0.0
    %v689 = vmul.f32 %v685, 0.01
    %v690 = vsel %vm688, %v685, %v689
    %v691 = vmul.f32 %v690, %v364
    %692 = vadd.xlane.f32.xlu0 %v691
    %v693 = vpop.xlane.xlu0 %692
    %v694 = vadd.f32 %v693, %v369
    %vm695 = vcmp.gt.f32.partialorder %v694, 0.0
    %v696 = vmul.f32 %v694, 0.01
    %v697 = vsel %vm695, %v694, %v696
    %v698 = vld [vmem:[#allocation9] sm:$0xff]
    %699 = vmatprep.subr.mxu0 0.0
    %700 = vmatpush1.msra.mxu0 %v283
    %701 = vmatprep.subr.mxu0 0.0
    %702 = vmatpush1.msra.mxu0 %v282
    %703 = vmatprep.subr.mxu0 0.0
    %704 = vmatpush1.msra.mxu0 %v281
    %705 = vmatprep.subr.mxu0 0.0
    %706 = vmatpush1.msra.mxu0 %v280
    %707 = vmatprep.subr.mxu0 0.0
    %708 = vmatpush1.msra.mxu0 %v279
    %709 = vmatprep.subr.mxu0 0.0
    %710 = vmatpush1.msra.mxu0 %v278
    %711 = vmatprep.subr.mxu0 0.0
    %712 = vmatpush1.msra.mxu0 %v277
    %713 = vmatprep.subr.mxu0 0.0
    %714 = vmatpush1.msra.mxu0 %v276
    %715 = vmatprep.subr.mxu0 0.0
    %716 = vmatpush1.msra.mxu0 %v275
    %717 = vmatprep.subr.mxu0 0.0
    %718 = vmatpush1.msra.mxu0 %v274
    %719 = vmatprep.subr.mxu0 0.0
    %720 = vmatpush1.msra.mxu0 %v273
    %721 = vmatprep.subr.mxu0 0.0
    %722 = vmatpush1.msra.mxu0 %v272
    %723 = vmatprep.subr.mxu0 0.0
    %724 = vmatpush1.msra.mxu0 %v271
    %725 = vmatprep.subr.mxu0 0.0
    %726 = vmatpush1.msra.mxu0 %v270
    %727 = vmatprep.subr.mxu0 0.0
    %728 = vmatpush1.msra.mxu0 %v269
    %729 = vmatprep.subr.mxu0 0.0
    %730 = vmatpush1.msra.mxu0 %v268
    %731 = vmatprep.subr.mxu0 0.0
    %732 = vmatpush2.msra.mxu0 0.0
    %733 = vmatprep.subr.mxu0 0.0
    %734 = vmatpush2.msra.mxu0 0.0
    %735 = vmatprep.subr.mxu0 0.0
    %736 = vmatpush2.msra.mxu0 0.0
    %737 = vmatprep.subr.mxu0 0.0
    %738 = vmatpush2.msra.mxu0 0.0
    %739 = vmatprep.subr.mxu0 0.0
    %740 = vmatpush2.msra.mxu0 0.0
    %741 = vmatprep.subr.mxu0 0.0
    %742 = vmatpush2.msra.mxu0 0.0
    %743 = vmatprep.subr.mxu0 0.0
    %744 = vmatpush2.msra.mxu0 0.0
    %745 = vmatprep.subr.mxu0 0.0
    %746 = vmatpush2.msra.mxu0 0.0
    %747 = vmatprep.subr.mxu0 0.0
    %748 = vmatpush2.msra.mxu0 0.0
    %749 = vmatprep.subr.mxu0 0.0
    %750 = vmatpush2.msra.mxu0 0.0
    %751 = vmatprep.subr.mxu0 0.0
    %752 = vmatpush2.msra.mxu0 0.0
    %753 = vmatprep.subr.mxu0 0.0
    %754 = vmatpush2.msra.mxu0 0.0
    %755 = vmatprep.subr.mxu0 0.0
    %756 = vmatpush2.msra.mxu0 0.0
    %757 = vmatprep.subr.mxu0 0.0
    %758 = vmatpush2.msra.mxu0 0.0
    %759 = vmatprep.subr.mxu0 0.0
    %760 = vmatpush2.msra.mxu0 0.0
    %761 = vmatprep.subr.mxu0 0.0
    %762 = vmatpush2.msra.mxu0 0.0
    %763 = vmatprep.mubr.f32.mxu0 0.0
    %764 = vmatmul.mubr.f32.gmra.mxu0 %v698
    %v765 = vpop.f32.mrf.mxu0
    %v766 = vadd.f32 %v267, %v765
    %v767 = vpop.f32.mrf.mxu0
    %768 = vdwg.mxu0
    %vm769 = vcmp.gt.f32.partialorder %v766, 0.0
    %v770 = vmul.f32 %v766, 0.01
    %v771 = vsel %vm769, %v766, %v770
    %v772 = vmul.f32 %v771, %v364
    %773 = vadd.xlane.f32.xlu0 %v772
    %v774 = vpop.xlane.xlu0 %773
    %v775 = vadd.f32 %v774, %v369
    %vm776 = vcmp.gt.f32.partialorder %v775, 0.0
    %v777 = vmul.f32 %v775, 0.01
    %v778 = vsel %vm776, %v775, %v777
    %v779 = vmax.f32 %v373, %v454
    %v780 = vmax.f32 %v779, %v535
    %v781 = vmax.f32 %v780, %v616
    %v782 = vmax.f32 %v781, %v697
    %v783 = vmax.f32 %v782, %v778
    %v784 = vsub.f32 %v373, %v783
    %v785 = vmul.f32 %v784, 1.442695
    %v786 = vpow.pop %v785
    %v787 = vsub.f32 %v454, %v783
    %v788 = vmul.f32 %v787, 1.442695
    %v789 = vpow.pop %v788
    %v790 = vsub.f32 %v535, %v783
    %v791 = vmul.f32 %v790, 1.442695
    %v792 = vpow.pop %v791
    %v793 = vsub.f32 %v616, %v783
    %v794 = vmul.f32 %v793, 1.442695
    %v795 = vpow.pop %v794
    %v796 = vsub.f32 %v697, %v783
    %v797 = vmul.f32 %v796, 1.442695
    %v798 = vpow.pop %v797
    %v799 = vsub.f32 %v778, %v783
    %v800 = vmul.f32 %v799, 1.442695
    %v801 = vpow.pop %v800
    %v802 = vadd.f32 %v786, %v789
    %v803 = vadd.f32 %v802, %v792
    %v804 = vadd.f32 %v803, %v795
    %v805 = vadd.f32 %v804, %v798
    %v806 = vadd.f32 %v805, %v801
    %v807 = vrcp.pop %v806
    %v808 = vmul.f32 1.0, %v807
    %v809 = vmul.f32 %v786, %v808
    %v810 = vmul.f32 %v789, %v808
    %v811 = vmul.f32 %v792, %v808
    %v812 = vmul.f32 %v795, %v808
    %v813 = vmul.f32 %v798, %v808
    %v814 = vmul.f32 %v801, %v808
    %v815 = vmul.f32 %v809, %v286
    %v816 = vmul.f32 %v810, %v374
    %v817 = vadd.f32 %v815, %v816
    %v818 = vmul.f32 %v811, %v455
    %v819 = vadd.f32 %v817, %v818
    %v820 = vmul.f32 %v812, %v536
    %v821 = vadd.f32 %v819, %v820
    %v822 = vmul.f32 %v813, %v617
    %v823 = vadd.f32 %v821, %v822
    %v824 = vmul.f32 %v814, %v698
    %v825 = vadd.f32 %v823, %v824
    %826 = vst [vmem:[#allocation17] sm:$0xff] %v825
    %827 = vst [vmem:[#allocation17 + $0x8] sm:$0xff] %v156
    %v828 = vld [vmem:[#allocation14] sm:$0xff]
    %v829 = vld [vmem:[#allocation14 + $0x8] sm:$0xff]
    %v830 = vld [vmem:[#allocation14 + $0x10] sm:$0xff]
    %v831 = vld [vmem:[#allocation14 + $0x18] sm:$0xff]
    %v832 = vld [vmem:[#allocation14 + $0x20] sm:$0xff]
    %v833 = vld [vmem:[#allocation14 + $0x28] sm:$0xff]
    %v834 = vld [vmem:[#allocation14 + $0x30] sm:$0xff]
    %v835 = vld [vmem:[#allocation14 + $0x38] sm:$0xff]
    %v836 = vld [vmem:[#allocation14 + $0x40] sm:$0xff]
    %v837 = vld [vmem:[#allocation14 + $0x48] sm:$0xff]
    %v838 = vld [vmem:[#allocation14 + $0x50] sm:$0xff]
    %v839 = vld [vmem:[#allocation14 + $0x58] sm:$0xff]
    %v840 = vld [vmem:[#allocation14 + $0x60] sm:$0xff]
    %v841 = vld [vmem:[#allocation14 + $0x68] sm:$0xff]
    %v842 = vld [vmem:[#allocation14 + $0x70] sm:$0xff]
    %v843 = vld [vmem:[#allocation14 + $0x78] sm:$0xff]
    %844 = vmatprep.subr.mxu0 0.0
    %845 = vmatpush1.msra.mxu0 %v843
    %846 = vmatprep.subr.mxu0 0.0
    %847 = vmatpush1.msra.mxu0 %v842
    %848 = vmatprep.subr.mxu0 0.0
    %849 = vmatpush1.msra.mxu0 %v841
    %850 = vmatprep.subr.mxu0 0.0
    %851 = vmatpush1.msra.mxu0 %v840
    %852 = vmatprep.subr.mxu0 0.0
    %853 = vmatpush1.msra.mxu0 %v839
    %854 = vmatprep.subr.mxu0 0.0
    %855 = vmatpush1.msra.mxu0 %v838
    %856 = vmatprep.subr.mxu0 0.0
    %857 = vmatpush1.msra.mxu0 %v837
    %858 = vmatprep.subr.mxu0 0.0
    %859 = vmatpush1.msra.mxu0 %v836
    %860 = vmatprep.subr.mxu0 0.0
    %861 = vmatpush1.msra.mxu0 %v835
    %862 = vmatprep.subr.mxu0 0.0
    %863 = vmatpush1.msra.mxu0 %v834
    %864 = vmatprep.subr.mxu0 0.0
    %865 = vmatpush1.msra.mxu0 %v833
    %866 = vmatprep.subr.mxu0 0.0
    %867 = vmatpush1.msra.mxu0 %v832
    %868 = vmatprep.subr.mxu0 0.0
    %869 = vmatpush1.msra.mxu0 %v831
    %870 = vmatprep.subr.mxu0 0.0
    %871 = vmatpush1.msra.mxu0 %v830
    %872 = vmatprep.subr.mxu0 0.0
    %873 = vmatpush1.msra.mxu0 %v829
    %874 = vmatprep.subr.mxu0 0.0
    %875 = vmatpush1.msra.mxu0 %v828
    %876 = vmatprep.subr.mxu0 0.0
    %877 = vmatpush2.msra.mxu0 0.0
    %878 = vmatprep.subr.mxu0 0.0
    %879 = vmatpush2.msra.mxu0 0.0
    %880 = vmatprep.subr.mxu0 0.0
    %881 = vmatpush2.msra.mxu0 0.0
    %882 = vmatprep.subr.mxu0 0.0
    %883 = vmatpush2.msra.mxu0 0.0
    %884 = vmatprep.subr.mxu0 0.0
    %885 = vmatpush2.msra.mxu0 0.0
    %886 = vmatprep.subr.mxu0 0.0
    %887 = vmatpush2.msra.mxu0 0.0
    %888 = vmatprep.subr.mxu0 0.0
    %889 = vmatpush2.msra.mxu0 0.0
    %890 = vmatprep.subr.mxu0 0.0
    %891 = vmatpush2.msra.mxu0 0.0
    %892 = vmatprep.subr.mxu0 0.0
    %893 = vmatpush2.msra.mxu0 0.0
    %894 = vmatprep.subr.mxu0 0.0
    %895 = vmatpush2.msra.mxu0 0.0
    %896 = vmatprep.subr.mxu0 0.0
    %897 = vmatpush2.msra.mxu0 0.0
    %898 = vmatprep.subr.mxu0 0.0
    %899 = vmatpush2.msra.mxu0 0.0
    %900 = vmatprep.subr.mxu0 0.0
    %901 = vmatpush2.msra.mxu0 0.0
    %902 = vmatprep.subr.mxu0 0.0
    %903 = vmatpush2.msra.mxu0 0.0
    %904 = vmatprep.subr.mxu0 0.0
    %905 = vmatpush2.msra.mxu0 0.0
    %906 = vmatprep.subr.mxu0 0.0
    %907 = vmatpush2.msra.mxu0 0.0
    %908 = vmatprep.mubr.f32.mxu0 0.0
    %909 = vmatmul.mubr.f32.gmra.mxu0 %v825
    %v910 = vpop.f32.mrf.mxu0
    %v911 = vadd.f32 %v258, %v910
    %v912 = vpop.f32.mrf.mxu0
    %913 = vdwg.mxu0
    %v914 = vld [vmem:[#allocation15] sm:$0x1]
    %v916 = vlaneseq
    %v917 = vshrl.u32 %v916, 7
    %v918 = vsub.s32 0, %v917
    %v919 = vrot.slane %v914, %v918
    %v921 = vadd.f32 %v911, %v919
    %vm922 = vcmp.gt.f32.partialorder %v921, 0.0
    %v923 = vmul.f32 %v921, 0.01
    %v924 = vsel %vm922, %v921, %v923
    %v925 = vld [vmem:[%s14] sm:$0xff]
    %v926 = vld [vmem:[%s14 + $0x8] sm:$0xff]
    %v927 = vld [vmem:[%s14 + $0x10] sm:$0xff]
    %v928 = vld [vmem:[%s14 + $0x18] sm:$0xff]
    %v929 = vld [vmem:[%s14 + $0x20] sm:$0xff]
    %v930 = vld [vmem:[%s14 + $0x28] sm:$0xff]
    %v931 = vld [vmem:[%s14 + $0x30] sm:$0xff]
    %v932 = vld [vmem:[%s14 + $0x38] sm:$0xff]
    %v933 = vld [vmem:[%s14 + $0x40] sm:$0xff]
    %v934 = vld [vmem:[%s14 + $0x48] sm:$0xff]
    %v935 = vld [vmem:[%s14 + $0x50] sm:$0xff]
    %v936 = vld [vmem:[%s14 + $0x58] sm:$0xff]
    %v937 = vld [vmem:[%s14 + $0x60] sm:$0xff]
    %v938 = vld [vmem:[%s14 + $0x68] sm:$0xff]
    %v939 = vld [vmem:[%s14 + $0x70] sm:$0xff]
    %v940 = vld [vmem:[%s14 + $0x78] sm:$0xff]
    %v941 = vld [vmem:[%s15] sm:$0x1]
    %v943 = vlaneseq
    %v944 = vshrl.u32 %v943, 7
    %v945 = vsub.s32 0, %v944
    %v946 = vrot.slane %v941, %v945
    %948 = vmatprep.subr.mxu0 0.0
    %949 = vmatpush1.msra.mxu0 %v940
    %950 = vmatprep.subr.mxu0 0.0
    %951 = vmatpush1.msra.mxu0 %v939
    %952 = vmatprep.subr.mxu0 0.0
    %953 = vmatpush1.msra.mxu0 %v938
    %954 = vmatprep.subr.mxu0 0.0
    %955 = vmatpush1.msra.mxu0 %v937
    %956 = vmatprep.subr.mxu0 0.0
    %957 = vmatpush1.msra.mxu0 %v936
    %958 = vmatprep.subr.mxu0 0.0
    %959 = vmatpush1.msra.mxu0 %v935
    %960 = vmatprep.subr.mxu0 0.0
    %961 = vmatpush1.msra.mxu0 %v934
    %962 = vmatprep.subr.mxu0 0.0
    %963 = vmatpush1.msra.mxu0 %v933
    %964 = vmatprep.subr.mxu0 0.0
    %965 = vmatpush1.msra.mxu0 %v932
    %966 = vmatprep.subr.mxu0 0.0
    %967 = vmatpush1.msra.mxu0 %v931
    %968 = vmatprep.subr.mxu0 0.0
    %969 = vmatpush1.msra.mxu0 %v930
    %970 = vmatprep.subr.mxu0 0.0
    %971 = vmatpush1.msra.mxu0 %v929
    %972 = vmatprep.subr.mxu0 0.0
    %973 = vmatpush1.msra.mxu0 %v928
    %974 = vmatprep.subr.mxu0 0.0
    %975 = vmatpush1.msra.mxu0 %v927
    %976 = vmatprep.subr.mxu0 0.0
    %977 = vmatpush1.msra.mxu0 %v926
    %978 = vmatprep.subr.mxu0 0.0
    %979 = vmatpush1.msra.mxu0 %v925
    %980 = vmatprep.subr.mxu0 0.0
    %981 = vmatpush2.msra.mxu0 0.0
    %982 = vmatprep.subr.mxu0 0.0
    %983 = vmatpush2.msra.mxu0 0.0
    %984 = vmatprep.subr.mxu0 0.0
    %985 = vmatpush2.msra.mxu0 0.0
    %986 = vmatprep.subr.mxu0 0.0
    %987 = vmatpush2.msra.mxu0 0.0
    %988 = vmatprep.subr.mxu0 0.0
    %989 = vmatpush2.msra.mxu0 0.0
    %990 = vmatprep.subr.mxu0 0.0
    %991 = vmatpush2.msra.mxu0 0.0
    %992 = vmatprep.subr.mxu0 0.0
    %993 = vmatpush2.msra.mxu0 0.0
    %994 = vmatprep.subr.mxu0 0.0
    %995 = vmatpush2.msra.mxu0 0.0
    %996 = vmatprep.subr.mxu0 0.0
    %997 = vmatpush2.msra.mxu0 0.0
    %998 = vmatprep.subr.mxu0 0.0
    %999 = vmatpush2.msra.mxu0 0.0
    %1000 = vmatprep.subr.mxu0 0.0
    %1001 = vmatpush2.msra.mxu0 0.0
    %1002 = vmatprep.subr.mxu0 0.0
    %1003 = vmatpush2.msra.mxu0 0.0
    %1004 = vmatprep.subr.mxu0 0.0
    %1005 = vmatpush2.msra.mxu0 0.0
    %1006 = vmatprep.subr.mxu0 0.0
    %1007 = vmatpush2.msra.mxu0 0.0
    %1008 = vmatprep.subr.mxu0 0.0
    %1009 = vmatpush2.msra.mxu0 0.0
    %1010 = vmatprep.subr.mxu0 0.0
    %1011 = vmatpush2.msra.mxu0 0.0
    %1012 = vmatprep.mubr.f32.mxu0 0.0
    %1013 = vmatmul.mubr.f32.gmra.mxu0 %v924
    %v1014 = vpop.f32.mrf.mxu0
    %v1015 = vadd.f32 %v946, %v1014
    %v1016 = vpop.f32.mrf.mxu0
    %1017 = vdwg.mxu0
    %vm1018 = vcmask 80896
    %1019 = vst.msk [vmem:[#allocation18] sm:$0xff] %vm1018, %v1015
    %v1020 = vlaneseq
    %v1021 = vand.u32 %v1020, 127
    %vm1022 = vcmp.eq.s32.totalorder %v1021, 0
    %v1023 = vsel %vm1022, 1, 0
    %vm1024 = vcmp.eq.s32.totalorder %v1023, 1
    %v1025 = vsel %vm1024, %v809, 0.0
    %v1026 = vadd.f32 %v1025, 0.0
    %vm1027 = vcmp.eq.s32.totalorder %v1021, 1
    %v1028 = vsel %vm1027, 1, 0
    %vm1029 = vcmp.eq.s32.totalorder %v1028, 1
    %v1030 = vsel %vm1029, %v810, 0.0
    %v1031 = vadd.f32 %v1026, %v1030
    %vm1032 = vcmp.eq.s32.totalorder %v1021, 2
    %v1033 = vsel %vm1032, 1, 0
    %vm1034 = vcmp.eq.s32.totalorder %v1033, 1
    %v1035 = vsel %vm1034, %v811, 0.0
    %v1036 = vadd.f32 %v1031, %v1035
    %vm1037 = vcmp.eq.s32.totalorder %v1021, 3
    %v1038 = vsel %vm1037, 1, 0
    %vm1039 = vcmp.eq.s32.totalorder %v1038, 1
    %v1040 = vsel %vm1039, %v812, 0.0
    %v1041 = vadd.f32 %v1036, %v1040
    %vm1042 = vcmp.eq.s32.totalorder %v1021, 4
    %v1043 = vsel %vm1042, 1, 0
    %vm1044 = vcmp.eq.s32.totalorder %v1043, 1
    %v1045 = vsel %vm1044, %v813, 0.0
    %v1046 = vadd.f32 %v1041, %v1045
    %vm1047 = vcmp.eq.s32.totalorder %v1021, 5
    %v1048 = vsel %vm1047, 1, 0
    %vm1049 = vcmp.eq.s32.totalorder %v1048, 1
    %v1050 = vsel %vm1049, %v814, 0.0
    %v1051 = vadd.f32 %v1046, %v1050
    %vm1052 = vcmask 48128
    %1053 = vst.msk [vmem:[#allocation20] sm:$0xff] %vm1052, %v1051
    // Predicated region
    $region98: #{tpu_custom_call.1} parent=1 // pred_check
      _
    $region99: #{tpu_custom_call.1} parent=1 // pred_check_branch
      %1055 = sbr.rel (0) target = $region101
    $region100: #{tpu_custom_call.1} parent=1 // pred_region
      %s1057 = ssub.s32 256, 256
      %1058 = vsyncadd [#allocation5], %s1057
      %s1060 = sshll.u32 [#allocation17], 4
      %s1061 = int_to_ptr.vmem [resolvable:$true] %s1060
      %1063 = dma.vmem_to_hbm [thread:$0]  %s1061, 256, %s16, [#allocation5]
    $region101: #{tpu_custom_call.1} parent=1 // pred_fallthru
      _
    // Predicated region
    $region102: #{tpu_custom_call.1} parent=1 // pred_check
      _
    $region103: #{tpu_custom_call.1} parent=1 // pred_check_branch
      %1065 = sbr.rel (0) target = $region105
    $region104: #{tpu_custom_call.1} parent=1 // pred_region
      %s1067 = ssub.s32 128, 128
      %1068 = vsyncadd [#allocation19], %s1067
      %s1070 = sshll.u32 [#allocation18], 4
      %s1071 = int_to_ptr.vmem [resolvable:$true] %s1070
      %1073 = dma.vmem_to_hbm [thread:$0]  %s1071, 128, %s17, [#allocation19]
    $region105: #{tpu_custom_call.1} parent=1 // pred_fallthru
      _
    // Predicated region
    $region106: #{tpu_custom_call.1} parent=1 // pred_check
      _
    $region107: #{tpu_custom_call.1} parent=1 // pred_check_branch
      %1075 = sbr.rel (0) target = $region109
    $region108: #{tpu_custom_call.1} parent=1 // pred_region
      %s1077 = ssub.s32 128, 128
      %1078 = vsyncadd [#allocation19], %s1077
      %s1080 = sshll.u32 [#allocation20], 4
      %s1081 = int_to_ptr.vmem [resolvable:$true] %s1080
      %1083 = dma.vmem_to_hbm [thread:$0]  %s1081, 128, %s18, [#allocation19]
    $region109: #{tpu_custom_call.1} parent=1 // pred_fallthru
      _
    // Predicated region
    $region110: #{tpu_custom_call.1} parent=1 // pred_check
      _
    $region111: #{tpu_custom_call.1} parent=1 // pred_check_branch
      %1085 = sbr.rel (0) target = $region113
    $region112: #{tpu_custom_call.1} parent=1 // pred_region
      %1086 = dma.done [#allocation5], 256
    $region113: #{tpu_custom_call.1} parent=1 // pred_fallthru
      _
    // Predicated region
    $region114: #{tpu_custom_call.1} parent=1 // pred_check
      _
    $region115: #{tpu_custom_call.1} parent=1 // pred_check_branch
      %1088 = sbr.rel (0) target = $region117
    $region116: #{tpu_custom_call.1} parent=1 // pred_region
      %1089 = dma.done [#allocation19], 128
    $region117: #{tpu_custom_call.1} parent=1 // pred_fallthru
      _
    // Predicated region
    $region118: #{tpu_custom_call.1} parent=1 // pred_check
      _
    $region119: #{tpu_custom_call.1} parent=1 // pred_check_branch
      %1091 = sbr.rel (0) target = $region121
    $region120: #{tpu_custom_call.1} parent=1 // pred_region
      %1092 = dma.done [#allocation19], 128
    $region121: #{tpu_custom_call.1} parent=1 // pred_fallthru
      _
    %1093 = vsyncpa [#allocation4], 1
    %1094 = vsyncpa [#allocation7], 1
    %1095 = vsyncpa [#allocation10], 1
    %1096 = vsyncpa [#allocation13], 1
    %1097 = vsyncpa [#allocation16], 1
    %1098 = vsyncpa [#allocation5], 1
    %1099 = vsyncpa [#allocation19], 1

</llo_original>
